<compile_context>
chip_gen: v6e
topology: v6e:2x2x1
jax: 0.10.0
libtpu: 0.0.40
codegen_flags: <defaults>
</compile_context>

<pallas_src>
import functools

import jax
import jax.numpy as jnp
from jax.experimental import pallas as pl
from jax.experimental.pallas import tpu as pltpu


KPARAM_ORDER = ("cw", "cb", "wfg", "bfg", "rw", "rb", "sw", "sb",
                "e1w", "e1b", "e2w", "e2b")


def _wavenet_kernel(dilations, pad_value, skip_chunk,
                    x_ref, cw_ref, cb_ref, wfg_ref, bfg_ref,
                    rw_ref, rb_ref, sw_ref, sb_ref,
                    e1w_ref, e1b_ref, e2w_ref, e2b_ref,
                    out_ref):
    f32 = jnp.float32
    bf16 = jnp.bfloat16
    Bt, L, Ci = x_ref.shape
    M = Bt * L                               # flattened rows in this block
    D = rw_ref.shape[1]                      # dilation_channels
    R = rw_ref.shape[2]                      # residual_channels
    S = sw_ref.shape[1]                      # skip_channels
    n_layers = len(dilations)

    x_in = x_ref[...].reshape(M, Ci).astype(f32)

    # causal_conv (1x1). With Ci == 1 this is a broadcast mul-add on the VPU;
    # a K=1 MXU contraction would waste a full systolic pass.
    if Ci == 1:
        x = x_in * cw_ref[...] + cb_ref[...]                     # (M,1)*(1,R)->(M,R)
    else:
        x = (jnp.dot(x_in.astype(bf16), cw_ref[...].astype(bf16),
                     preferred_element_type=f32) + cb_ref[...])

    # Hoisted once (JAX does not CSE iota): local position within each batch
    # row.  Used to mask the tap-1 roll; it also kills any cross-batch wrap of
    # the flattened roll, since exactly those rows (pos >= L - d) read padding.
    pos = jax.lax.broadcasted_iota(jnp.int32, (Bt, L, R), 1).reshape(M, R)

    skip = jnp.zeros((M, S), f32)
    outs = []
    chunk_start = 0
    for i, d in enumerate(dilations):
        # tap-1 input: x[t + d] within each batch row, right-padded with
        # pad_value (prefix_pad=False).  pltpu.roll runs on the XLU slot.
        if d >= L:
            x_shift = jnp.full_like(x, pad_value)
        else:
            rolled = pltpu.roll(x, shift=(M - d) % M, axis=0)    # rolled[t] = x[(t+d)%M]
            x_shift = jnp.where(pos >= L - d, pad_value, rolled)

        # Fused filter+gate, both taps: one (M, 2R) @ (2R, 2D) MXU push.
        z = jnp.concatenate([x, x_shift], axis=-1).astype(bf16)  # (M, 2R)
        fg = jnp.dot(z, wfg_ref[i], preferred_element_type=f32) + bfg_ref[i]
        # Gate weights/bias were pre-scaled by 0.5 at repack time, so a single
        # full-width tanh covers both halves: sigmoid(u) = 0.5*tanh(u/2) + 0.5.
        t = jnp.tanh(fg)                                         # (M, 2D) f32
        out = t[:, :D] * (0.5 * t[:, D:] + 0.5)                  # (M, D) f32
        outs.append(out)

        # residual 1x1
        x = x + jnp.dot(out.astype(bf16), rw_ref[i],
                        preferred_element_type=f32) + rb_ref[i]

        # Chunked skip projection: one (M, C*D) @ (C*D, S) matmul per chunk
        # into the f32 accumulator.  Caps live activation memory at C*(M*D*4)
        # bytes while keeping the MXU contraction depth at C*D.
        if len(outs) == skip_chunk or i == n_layers - 1:
            cat = (outs[0] if len(outs) == 1
                   else jnp.concatenate(outs, axis=-1)).astype(bf16)
            k0, k1 = chunk_start * D, (i + 1) * D                # static slice
            skip = skip + jnp.dot(cat, sw_ref[k0:k1, :],
                                  preferred_element_type=f32)
            outs = []
            chunk_start = i + 1

    # Per-layer skip biases were pre-summed into sb; added once.
    skip = skip + sb_ref[...]

    h = jnp.maximum(skip, 0.0)                                   # relu(skip)
    h = jnp.maximum(jnp.dot(h.astype(bf16), e1w_ref[...],
                            preferred_element_type=f32) + e1b_ref[...], 0.0)
    # end_conv_2 with output lanes zero-padded to 128 -> lane-dense store.
    y = jnp.dot(h.astype(bf16), e2w_ref[...],
                preferred_element_type=f32) + e2b_ref[...]       # (M, O_pad)
    out_ref[...] = y.reshape(Bt, L, out_ref.shape[2]).astype(out_ref.dtype)


def _pick_batch_tile(B, L, target_rows=1024):
    """Largest divisor Bt of B with Bt*L <= target_rows (amortize MXU fill /
    per-grid-step overhead), but keep >= 2 grid steps when B >= 2 so the
    'parallel' batch axis can feed both v7x TensorCores."""
    bt = 1
    for cand in range(1, B + 1):
        if B % cand == 0 and cand * L <= target_rows:
            bt = cand
    while bt > 1 and B // bt < 2:
        bt = max(d for d in range(1, bt) if B % d == 0)
    return bt


def wavenet_pallas(x_nlc, params, dilations, pad_value=-1.0, *,
                   skip_chunk_layers=8,        # 8 -> K=256 (v6e/v7x), 4 -> K=128 (v5e)
                   batch_tile=None,
                   vmem_limit_bytes=56 * 1024 * 1024,
                   out_dtype=jnp.float32):     # bf16 halves the padded HBM writeback
    """x_nlc: (B, L, sample_channels) float32. Returns (B, L, output_channels)."""
    B, L, Ci = x_nlc.shape
    n_layers = params["fw0"].shape[0]
    R = params["cw"].shape[-1]
    D = params["fw0"].shape[-1]
    S = params["sw"].shape[-1]
    O = params["e2w"].shape[-1]
    O_pad = max(128, ((O + 127) // 128) * 128)

    f32, bf16 = jnp.float32, jnp.bfloat16

    Bt = batch_tile if batch_tile is not None else _pick_batch_tile(B, L)
    assert B % Bt == 0, (B, Bt)
    skip_chunk = max(1, int(skip_chunk_layers))

    # ---- weight repacking (trace-time; constant-folded under jit) ----
    # Fused tap0/tap1 filter+gate weights: [[fw0|0.5*gw0],[fw1|0.5*gw1]]
    # -> (n, 2R, 2D).  The 0.5 gate pre-scale enables the single-tanh gate.
    wfg = jnp.concatenate(
        [jnp.concatenate([params["fw0"], 0.5 * params["gw0"]], axis=-1),
         jnp.concatenate([params["fw1"], 0.5 * params["gw1"]], axis=-1)],
        axis=1).astype(bf16)
    bfg = jnp.concatenate([params["fb"], 0.5 * params["gb"]], axis=-1).astype(f32)
    rw = params["rw"].astype(bf16)
    rb = params["rb"].astype(f32)
    sw = params["sw"].reshape(n_layers * D, S).astype(bf16)       # stacked-K skip weight
    sb = params["sb"].sum(axis=0).astype(f32)                     # biases added once
    e1w = params["e1w"].astype(bf16)
    e1b = params["e1b"].astype(f32)
    e2w = jnp.pad(params["e2w"], ((0, 0), (0, O_pad - O))).astype(bf16)
    e2b = jnp.pad(params["e2b"], ((0, 0), (0, O_pad - O))).astype(f32)
    cw = params["cw"].astype(f32)                                 # VPU path stays f32
    cb = params["cb"].astype(f32)

    kparams = dict(cw=cw, cb=cb, wfg=wfg, bfg=bfg, rw=rw, rb=rb, sw=sw, sb=sb,
                   e1w=e1w, e1b=e1b, e2w=e2w, e2b=e2b)
    kargs = [kparams[k] for k in KPARAM_ORDER]

    kernel = functools.partial(_wavenet_kernel,
                               tuple(int(d) for d in dilations),
                               float(pad_value),
                               skip_chunk)

    def full_spec(shape):
        n = len(shape)
        return pl.BlockSpec(shape, lambda b, n=n: (0,) * n)

    in_specs = [pl.BlockSpec((Bt, L, Ci), lambda b: (b, 0, 0))]
    in_specs += [full_spec(p.shape) for p in kargs]

    # Advisory cost hint for the XLA scheduler.
    flops = 2 * B * L * (n_layers * (2 * R * 2 * D + D * R + D * S)
                         + S * S + S * O_pad)
    transcendentals = 2 * B * L * D * n_layers
    bytes_accessed = (int(x_nlc.size) * 4
                      + B * L * O_pad * jnp.dtype(out_dtype).itemsize
                      + sum(int(p.size) * p.dtype.itemsize for p in kargs))

    y = pl.pallas_call(
        kernel,
        out_shape=jax.ShapeDtypeStruct((B, L, O_pad), out_dtype),
        grid_spec=pltpu.PrefetchScalarGridSpec(
            num_scalar_prefetch=0,
            grid=(B // Bt,),
            in_specs=in_specs,
            out_specs=pl.BlockSpec((Bt, L, O_pad), lambda b: (b, 0, 0)),
        ),
        compiler_params=pltpu.CompilerParams(
            dimension_semantics=("parallel",),
            vmem_limit_bytes=int(vmem_limit_bytes)),
        cost_estimate=pl.CostEstimate(flops=flops,
                                      transcendentals=transcendentals,
                                      bytes_accessed=bytes_accessed),
    )(x_nlc.astype(f32), *kargs)

    return y[..., :O].astype(x_nlc.dtype)


def init_params(key, *, dilation_layers, dilation_blocks, sample_channels=1,
                residual_channels=32, dilation_channels=32, skip_channels=512,
                output_channels=1):
    """Deterministic synthetic weights; conv weights stored as (C_in, C_out)."""
    n_layers = dilation_blocks * dilation_layers
    dilations = []
    for _ in range(dilation_blocks):
        d = 1
        for _ in range(dilation_layers):
            dilations.append(d)
            d *= 2

    keys = jax.random.split(key, 16)
    R, D, S, O, Ci = (residual_channels, dilation_channels, skip_channels,
                      output_channels, sample_channels)

    def w(k, shape, fan_in):
        return jax.random.normal(k, shape, jnp.float32) / jnp.sqrt(fan_in)

    p = dict(
        cw=w(keys[0], (Ci, R), Ci),            cb=0.1 * w(keys[1], (1, R), 1.0),
        fw0=w(keys[2], (n_layers, R, D), R),   fw1=w(keys[3], (n_layers, R, D), R),
        fb=0.1 * w(keys[4], (n_layers, 1, D), 1.0),
        gw0=w(keys[5], (n_layers, R, D), R),   gw1=w(keys[6], (n_layers, R, D), R),
        gb=0.1 * w(keys[7], (n_layers, 1, D), 1.0),
        rw=w(keys[8], (n_layers, D, R), D),    rb=0.1 * w(keys[9], (n_layers, 1, R), 1.0),
        sw=w(keys[10], (n_layers, D, S), D),   sb=0.1 * w(keys[11], (n_layers, 1, S), 1.0),
        e1w=w(keys[12], (S, S), S),            e1b=0.1 * w(keys[13], (1, S), 1.0),
        e2w=w(keys[14], (S, O), S),            e2b=0.1 * w(keys[15], (1, O), 1.0),
    )
    return p, tuple(dilations)


def wavenet_ref(x, p, dilations, pad_value=-1.0, matmul_dtype=jnp.float32):
    """Pure-JAX reference of the same forward pass (NLC layout).

    matmul_dtype=bfloat16 mimics the kernel's matmul-operand casts (f32 accum)
    for a tight structural check; float32 gives the exact PyTorch-semantics ref.
    """
    L = x.shape[1]
    md = matmul_dtype
    mm = lambda a, w_: jnp.einsum("blc,cd->bld", a.astype(md), w_.astype(md),
                                  preferred_element_type=jnp.float32)
    # causal conv in f32 (kernel uses a f32 VPU mul-add for sample_channels==1)
    h = jnp.einsum("blc,cd->bld", x, p["cw"],
                   preferred_element_type=jnp.float32) + p["cb"]
    skip = jnp.zeros((x.shape[0], L, p["sw"].shape[-1]), jnp.float32)
    for i, d in enumerate(dilations):
        hp = jnp.pad(h, ((0, 0), (0, d), (0, 0)), constant_values=pad_value)
        t0, t1 = hp[:, :L, :], hp[:, d:L + d, :]
        f = jnp.tanh(mm(t0, p["fw0"][i]) + mm(t1, p["fw1"][i]) + p["fb"][i])
        g = jax.nn.sigmoid(mm(t0, p["gw0"][i]) + mm(t1, p["gw1"][i]) + p["gb"][i])
        out = f * g
        h = h + mm(out, p["rw"][i]) + p["rb"][i]
        skip = skip + mm(out, p["sw"][i]) + p["sb"][i]
    s = jax.nn.relu(skip)
    s = jax.nn.relu(mm(s, p["e1w"]) + p["e1b"])
    return mm(s, p["e2w"]) + p["e2b"]


if __name__ == "__main__":
    key = jax.random.PRNGKey(0)
    kp, kx = jax.random.split(key)

    B, L = 2, 16
    params, dilations = init_params(
        kp, dilation_layers=3, dilation_blocks=2, sample_channels=1,
        residual_channels=32, dilation_channels=32, skip_channels=64,
        output_channels=1)

    # PyTorch input would be NCW (B, 1, L); kernel layout is NLC (B, L, 1).
    x = jax.random.normal(kx, (B, L, 1), jnp.float32)

    # Default path (auto batch tile -> 2 grid steps for megacore).
    y = wavenet_pallas(x, params, dilations, pad_value=-1.0)
    y = jax.block_until_ready(y)
    assert y.shape == (B, L, 1), y.shape

    # Also exercise the batch-blocked path (Bt=2 -> flattened rows = Bt*L) and
    # a small skip-chunk to exercise chunked skip accumulation.
    y_bt = wavenet_pallas(x, params, dilations, pad_value=-1.0,
                          batch_tile=2, skip_chunk_layers=4)
    y_bt = jax.block_until_ready(y_bt)
    assert y_bt.shape == (B, L, 1), y_bt.shape

    # Tight check vs. a reference that uses the same bf16 matmul operands.
    y_bf16 = wavenet_ref(x, params, dilations, pad_value=-1.0,
                         matmul_dtype=jnp.bfloat16)
    # Looser check vs. the pure-f32 (PyTorch-semantics) reference; the gap is
    # bf16 operand quantization only.
    y_f32 = wavenet_ref(x, params, dilations, pad_value=-1.0,
                        matmul_dtype=jnp.float32)

    err_bf16 = float(jnp.max(jnp.abs(y - y_bf16)))
    err_f32 = float(jnp.max(jnp.abs(y - y_f32)))
    err_bt = float(jnp.max(jnp.abs(y_bt - y_bf16)))
    assert jnp.allclose(y, y_bf16, atol=5e-3, rtol=5e-3), err_bf16
    assert jnp.allclose(y, y_f32, atol=3e-2, rtol=3e-2), err_f32
    assert jnp.allclose(y_bt, y_bf16, atol=5e-3, rtol=5e-3), err_bt

    print("KERNEL_OK")
</pallas_src>

<mosaic_0001>
module attributes {stable_mosaic.version = 11 : i64} {
  func.func @_wavenet_kernel(%arg0: i32, %arg1: memref<1x16x1xf32, #tpu.memory_space<vmem>>, %arg2: memref<1x32xf32, #tpu.memory_space<vmem>>, %arg3: memref<1x32xf32, #tpu.memory_space<vmem>>, %arg4: memref<6x64x64xbf16, #tpu.memory_space<vmem>>, %arg5: memref<6x1x64xf32, #tpu.memory_space<vmem>>, %arg6: memref<6x32x32xbf16, #tpu.memory_space<vmem>>, %arg7: memref<6x1x32xf32, #tpu.memory_space<vmem>>, %arg8: memref<192x64xbf16, #tpu.memory_space<vmem>>, %arg9: memref<1x64xf32, #tpu.memory_space<vmem>>, %arg10: memref<64x64xbf16, #tpu.memory_space<vmem>>, %arg11: memref<1x64xf32, #tpu.memory_space<vmem>>, %arg12: memref<64x128xbf16, #tpu.memory_space<vmem>>, %arg13: memref<1x128xf32, #tpu.memory_space<vmem>>, %arg14: memref<1x16x128xf32, #tpu.memory_space<vmem>>) attributes {dimension_semantics = [#tpu.dimension_semantics<parallel>], iteration_bounds = array<i64: 2>, scalar_prefetch = 0 : i64, scratch_operands = 0 : i64, tpu.core_type = #tpu.core_type<tc>, window_params = [{transform_indices = @transform_0, window_bounds = array<i64: 1, 16, 1>}, {pipeline_mode = #tpu.pipeline_mode<synchronous>, transform_indices = @transform_1, window_bounds = array<i64: 1, 32>}, {pipeline_mode = #tpu.pipeline_mode<synchronous>, transform_indices = @transform_2, window_bounds = array<i64: 1, 32>}, {pipeline_mode = #tpu.pipeline_mode<synchronous>, transform_indices = @transform_3, window_bounds = array<i64: 6, 64, 64>}, {pipeline_mode = #tpu.pipeline_mode<synchronous>, transform_indices = @transform_4, window_bounds = array<i64: 6, 1, 64>}, {pipeline_mode = #tpu.pipeline_mode<synchronous>, transform_indices = @transform_5, window_bounds = array<i64: 6, 32, 32>}, {pipeline_mode = #tpu.pipeline_mode<synchronous>, transform_indices = @transform_6, window_bounds = array<i64: 6, 1, 32>}, {pipeline_mode = #tpu.pipeline_mode<synchronous>, transform_indices = @transform_7, window_bounds = array<i64: 192, 64>}, {pipeline_mode = #tpu.pipeline_mode<synchronous>, transform_indices = @transform_8, window_bounds = array<i64: 1, 64>}, {pipeline_mode = #tpu.pipeline_mode<synchronous>, transform_indices = @transform_9, window_bounds = array<i64: 64, 64>}, {pipeline_mode = #tpu.pipeline_mode<synchronous>, transform_indices = @transform_10, window_bounds = array<i64: 1, 64>}, {pipeline_mode = #tpu.pipeline_mode<synchronous>, transform_indices = @transform_11, window_bounds = array<i64: 64, 128>}, {pipeline_mode = #tpu.pipeline_mode<synchronous>, transform_indices = @transform_12, window_bounds = array<i64: 1, 128>}, {transform_indices = @transform_13, window_bounds = array<i64: 1, 16, 128>}]} {
    %c0 = arith.constant 0 : index
    %c0_0 = arith.constant 0 : index
    %c0_1 = arith.constant 0 : index
    %0 = vector.load %arg1[%c0, %c0_0, %c0_1] : memref<1x16x1xf32, #tpu.memory_space<vmem>>, vector<1x16x1xf32>
    %1 = vector.shape_cast %0 : vector<1x16x1xf32> to vector<16x1xf32>
    %c0_2 = arith.constant 0 : index
    %c0_3 = arith.constant 0 : index
    %2 = vector.load %arg2[%c0_2, %c0_3] : memref<1x32xf32, #tpu.memory_space<vmem>>, vector<1x32xf32>
    %3 = vector.broadcast %1 : vector<16x1xf32> to vector<16x32xf32>
    %4 = vector.broadcast %2 : vector<1x32xf32> to vector<16x32xf32>
    %5 = arith.mulf %3, %4 : vector<16x32xf32>
    %c0_4 = arith.constant 0 : index
    %c0_5 = arith.constant 0 : index
    %6 = vector.load %arg3[%c0_4, %c0_5] : memref<1x32xf32, #tpu.memory_space<vmem>>, vector<1x32xf32>
    %7 = vector.broadcast %6 : vector<1x32xf32> to vector<16x32xf32>
    %8 = arith.addf %5, %7 : vector<16x32xf32>
    %9 = tpu.iota {dimensions = array<i32: 1>} : vector<1x16x32xi32>
    %10 = vector.shape_cast %9 : vector<1x16x32xi32> to vector<16x32xi32>
    %cst = arith.constant 0.000000e+00 : f32
    %11 = vector.broadcast %cst : f32 to vector<16x64xf32>
    %c15_i32 = arith.constant 15 : i32
    %12 = tpu.dynamic_rotate %8 by %c15_i32 dim 0 : vector<16x32xf32>, i32 -> vector<16x32xf32>
    %c15_i32_6 = arith.constant 15 : i32
    %13 = vector.broadcast %c15_i32_6 : i32 to vector<16x32xi32>
    %14 = arith.cmpi sge, %10, %13 : vector<16x32xi32>
    %cst_7 = arith.constant -1.000000e+00 : f32
    %15 = vector.broadcast %cst_7 : f32 to vector<16x32xf32>
    %16 = arith.select %14, %15, %12 : vector<16x32xi1>, vector<16x32xf32>
    %17 = tpu.concatenate %8, %16 in 1 : vector<16x32xf32>, vector<16x32xf32> -> vector<16x64xf32>
    %18 = arith.truncf %17 : vector<16x64xf32> to vector<16x64xbf16>
    %c0_8 = arith.constant 0 : index
    %c0_9 = arith.constant 0 : index
    %c0_10 = arith.constant 0 : index
    %19 = vector.load %arg4[%c0_8, %c0_9, %c0_10] : memref<6x64x64xbf16, #tpu.memory_space<vmem>>, vector<1x64x64xbf16>
    %20 = vector.shape_cast %19 : vector<1x64x64xbf16> to vector<64x64xbf16>
    %cst_11 = arith.constant dense<0.000000e+00> : vector<16x64xf32>
    %21 = tpu.matmul %18, %20, %cst_11 {dimension_numbers = #tpu.dot_dimension_numbers<[1], [0], [0], [1], [0, 0, 1, 1], [], []>} : vector<16x64xbf16>, vector<64x64xbf16>, vector<16x64xf32> -> vector<16x64xf32>
    %c0_12 = arith.constant 0 : index
    %c0_13 = arith.constant 0 : index
    %c0_14 = arith.constant 0 : index
    %22 = vector.load %arg5[%c0_12, %c0_13, %c0_14] : memref<6x1x64xf32, #tpu.memory_space<vmem>>, vector<1x1x64xf32>
    %23 = vector.shape_cast %22 : vector<1x1x64xf32> to vector<1x64xf32>
    %24 = vector.broadcast %23 : vector<1x64xf32> to vector<16x64xf32>
    %25 = arith.addf %21, %24 : vector<16x64xf32>
    %26 = math.tanh %25 : vector<16x64xf32>
    %27 = vector.extract_strided_slice %26 {offsets = [0, 0], sizes = [16, 32], strides = [1, 1]} : vector<16x64xf32> to vector<16x32xf32>
    %28 = vector.extract_strided_slice %26 {offsets = [0, 32], sizes = [16, 32], strides = [1, 1]} : vector<16x64xf32> to vector<16x32xf32>
    %cst_15 = arith.constant 5.000000e-01 : f32
    %29 = vector.broadcast %cst_15 : f32 to vector<16x32xf32>
    %30 = arith.mulf %29, %28 : vector<16x32xf32>
    %cst_16 = arith.constant 5.000000e-01 : f32
    %31 = vector.broadcast %cst_16 : f32 to vector<16x32xf32>
    %32 = arith.addf %30, %31 : vector<16x32xf32>
    %33 = arith.mulf %27, %32 : vector<16x32xf32>
    %34 = arith.truncf %33 : vector<16x32xf32> to vector<16x32xbf16>
    %c0_17 = arith.constant 0 : index
    %c0_18 = arith.constant 0 : index
    %c0_19 = arith.constant 0 : index
    %35 = vector.load %arg6[%c0_17, %c0_18, %c0_19] : memref<6x32x32xbf16, #tpu.memory_space<vmem>>, vector<1x32x32xbf16>
    %36 = vector.shape_cast %35 : vector<1x32x32xbf16> to vector<32x32xbf16>
    %cst_20 = arith.constant dense<0.000000e+00> : vector<16x32xf32>
    %37 = tpu.matmul %34, %36, %cst_20 {dimension_numbers = #tpu.dot_dimension_numbers<[1], [0], [0], [1], [0, 0, 1, 1], [], []>} : vector<16x32xbf16>, vector<32x32xbf16>, vector<16x32xf32> -> vector<16x32xf32>
    %38 = arith.addf %8, %37 : vector<16x32xf32>
    %c0_21 = arith.constant 0 : index
    %c0_22 = arith.constant 0 : index
    %c0_23 = arith.constant 0 : index
    %39 = vector.load %arg7[%c0_21, %c0_22, %c0_23] : memref<6x1x32xf32, #tpu.memory_space<vmem>>, vector<1x1x32xf32>
    %40 = vector.shape_cast %39 : vector<1x1x32xf32> to vector<1x32xf32>
    %41 = vector.broadcast %40 : vector<1x32xf32> to vector<16x32xf32>
    %42 = arith.addf %38, %41 : vector<16x32xf32>
    %c14_i32 = arith.constant 14 : i32
    %43 = tpu.dynamic_rotate %42 by %c14_i32 dim 0 : vector<16x32xf32>, i32 -> vector<16x32xf32>
    %c14_i32_24 = arith.constant 14 : i32
    %44 = vector.broadcast %c14_i32_24 : i32 to vector<16x32xi32>
    %45 = arith.cmpi sge, %10, %44 : vector<16x32xi32>
    %cst_25 = arith.constant -1.000000e+00 : f32
    %46 = vector.broadcast %cst_25 : f32 to vector<16x32xf32>
    %47 = arith.select %45, %46, %43 : vector<16x32xi1>, vector<16x32xf32>
    %48 = tpu.concatenate %42, %47 in 1 : vector<16x32xf32>, vector<16x32xf32> -> vector<16x64xf32>
    %49 = arith.truncf %48 : vector<16x64xf32> to vector<16x64xbf16>
    %c1 = arith.constant 1 : index
    %c0_26 = arith.constant 0 : index
    %c0_27 = arith.constant 0 : index
    %50 = vector.load %arg4[%c1, %c0_26, %c0_27] : memref<6x64x64xbf16, #tpu.memory_space<vmem>>, vector<1x64x64xbf16>
    %51 = vector.shape_cast %50 : vector<1x64x64xbf16> to vector<64x64xbf16>
    %cst_28 = arith.constant dense<0.000000e+00> : vector<16x64xf32>
    %52 = tpu.matmul %49, %51, %cst_28 {dimension_numbers = #tpu.dot_dimension_numbers<[1], [0], [0], [1], [0, 0, 1, 1], [], []>} : vector<16x64xbf16>, vector<64x64xbf16>, vector<16x64xf32> -> vector<16x64xf32>
    %c1_29 = arith.constant 1 : index
    %c0_30 = arith.constant 0 : index
    %c0_31 = arith.constant 0 : index
    %53 = vector.load %arg5[%c1_29, %c0_30, %c0_31] : memref<6x1x64xf32, #tpu.memory_space<vmem>>, vector<1x1x64xf32>
    %54 = vector.shape_cast %53 : vector<1x1x64xf32> to vector<1x64xf32>
    %55 = vector.broadcast %54 : vector<1x64xf32> to vector<16x64xf32>
    %56 = arith.addf %52, %55 : vector<16x64xf32>
    %57 = math.tanh %56 : vector<16x64xf32>
    %58 = vector.extract_strided_slice %57 {offsets = [0, 0], sizes = [16, 32], strides = [1, 1]} : vector<16x64xf32> to vector<16x32xf32>
    %59 = vector.extract_strided_slice %57 {offsets = [0, 32], sizes = [16, 32], strides = [1, 1]} : vector<16x64xf32> to vector<16x32xf32>
    %cst_32 = arith.constant 5.000000e-01 : f32
    %60 = vector.broadcast %cst_32 : f32 to vector<16x32xf32>
    %61 = arith.mulf %60, %59 : vector<16x32xf32>
    %cst_33 = arith.constant 5.000000e-01 : f32
    %62 = vector.broadcast %cst_33 : f32 to vector<16x32xf32>
    %63 = arith.addf %61, %62 : vector<16x32xf32>
    %64 = arith.mulf %58, %63 : vector<16x32xf32>
    %65 = arith.truncf %64 : vector<16x32xf32> to vector<16x32xbf16>
    %c1_34 = arith.constant 1 : index
    %c0_35 = arith.constant 0 : index
    %c0_36 = arith.constant 0 : index
    %66 = vector.load %arg6[%c1_34, %c0_35, %c0_36] : memref<6x32x32xbf16, #tpu.memory_space<vmem>>, vector<1x32x32xbf16>
    %67 = vector.shape_cast %66 : vector<1x32x32xbf16> to vector<32x32xbf16>
    %cst_37 = arith.constant dense<0.000000e+00> : vector<16x32xf32>
    %68 = tpu.matmul %65, %67, %cst_37 {dimension_numbers = #tpu.dot_dimension_numbers<[1], [0], [0], [1], [0, 0, 1, 1], [], []>} : vector<16x32xbf16>, vector<32x32xbf16>, vector<16x32xf32> -> vector<16x32xf32>
    %69 = arith.addf %42, %68 : vector<16x32xf32>
    %c1_38 = arith.constant 1 : index
    %c0_39 = arith.constant 0 : index
    %c0_40 = arith.constant 0 : index
    %70 = vector.load %arg7[%c1_38, %c0_39, %c0_40] : memref<6x1x32xf32, #tpu.memory_space<vmem>>, vector<1x1x32xf32>
    %71 = vector.shape_cast %70 : vector<1x1x32xf32> to vector<1x32xf32>
    %72 = vector.broadcast %71 : vector<1x32xf32> to vector<16x32xf32>
    %73 = arith.addf %69, %72 : vector<16x32xf32>
    %c12_i32 = arith.constant 12 : i32
    %74 = tpu.dynamic_rotate %73 by %c12_i32 dim 0 : vector<16x32xf32>, i32 -> vector<16x32xf32>
    %c12_i32_41 = arith.constant 12 : i32
    %75 = vector.broadcast %c12_i32_41 : i32 to vector<16x32xi32>
    %76 = arith.cmpi sge, %10, %75 : vector<16x32xi32>
    %cst_42 = arith.constant -1.000000e+00 : f32
    %77 = vector.broadcast %cst_42 : f32 to vector<16x32xf32>
    %78 = arith.select %76, %77, %74 : vector<16x32xi1>, vector<16x32xf32>
    %79 = tpu.concatenate %73, %78 in 1 : vector<16x32xf32>, vector<16x32xf32> -> vector<16x64xf32>
    %80 = arith.truncf %79 : vector<16x64xf32> to vector<16x64xbf16>
    %c2 = arith.constant 2 : index
    %c0_43 = arith.constant 0 : index
    %c0_44 = arith.constant 0 : index
    %81 = vector.load %arg4[%c2, %c0_43, %c0_44] : memref<6x64x64xbf16, #tpu.memory_space<vmem>>, vector<1x64x64xbf16>
    %82 = vector.shape_cast %81 : vector<1x64x64xbf16> to vector<64x64xbf16>
    %cst_45 = arith.constant dense<0.000000e+00> : vector<16x64xf32>
    %83 = tpu.matmul %80, %82, %cst_45 {dimension_numbers = #tpu.dot_dimension_numbers<[1], [0], [0], [1], [0, 0, 1, 1], [], []>} : vector<16x64xbf16>, vector<64x64xbf16>, vector<16x64xf32> -> vector<16x64xf32>
    %c2_46 = arith.constant 2 : index
    %c0_47 = arith.constant 0 : index
    %c0_48 = arith.constant 0 : index
    %84 = vector.load %arg5[%c2_46, %c0_47, %c0_48] : memref<6x1x64xf32, #tpu.memory_space<vmem>>, vector<1x1x64xf32>
    %85 = vector.shape_cast %84 : vector<1x1x64xf32> to vector<1x64xf32>
    %86 = vector.broadcast %85 : vector<1x64xf32> to vector<16x64xf32>
    %87 = arith.addf %83, %86 : vector<16x64xf32>
    %88 = math.tanh %87 : vector<16x64xf32>
    %89 = vector.extract_strided_slice %88 {offsets = [0, 0], sizes = [16, 32], strides = [1, 1]} : vector<16x64xf32> to vector<16x32xf32>
    %90 = vector.extract_strided_slice %88 {offsets = [0, 32], sizes = [16, 32], strides = [1, 1]} : vector<16x64xf32> to vector<16x32xf32>
    %cst_49 = arith.constant 5.000000e-01 : f32
    %91 = vector.broadcast %cst_49 : f32 to vector<16x32xf32>
    %92 = arith.mulf %91, %90 : vector<16x32xf32>
    %cst_50 = arith.constant 5.000000e-01 : f32
    %93 = vector.broadcast %cst_50 : f32 to vector<16x32xf32>
    %94 = arith.addf %92, %93 : vector<16x32xf32>
    %95 = arith.mulf %89, %94 : vector<16x32xf32>
    %96 = arith.truncf %95 : vector<16x32xf32> to vector<16x32xbf16>
    %c2_51 = arith.constant 2 : index
    %c0_52 = arith.constant 0 : index
    %c0_53 = arith.constant 0 : index
    %97 = vector.load %arg6[%c2_51, %c0_52, %c0_53] : memref<6x32x32xbf16, #tpu.memory_space<vmem>>, vector<1x32x32xbf16>
    %98 = vector.shape_cast %97 : vector<1x32x32xbf16> to vector<32x32xbf16>
    %cst_54 = arith.constant dense<0.000000e+00> : vector<16x32xf32>
    %99 = tpu.matmul %96, %98, %cst_54 {dimension_numbers = #tpu.dot_dimension_numbers<[1], [0], [0], [1], [0, 0, 1, 1], [], []>} : vector<16x32xbf16>, vector<32x32xbf16>, vector<16x32xf32> -> vector<16x32xf32>
    %100 = arith.addf %73, %99 : vector<16x32xf32>
    %c2_55 = arith.constant 2 : index
    %c0_56 = arith.constant 0 : index
    %c0_57 = arith.constant 0 : index
    %101 = vector.load %arg7[%c2_55, %c0_56, %c0_57] : memref<6x1x32xf32, #tpu.memory_space<vmem>>, vector<1x1x32xf32>
    %102 = vector.shape_cast %101 : vector<1x1x32xf32> to vector<1x32xf32>
    %103 = vector.broadcast %102 : vector<1x32xf32> to vector<16x32xf32>
    %104 = arith.addf %100, %103 : vector<16x32xf32>
    %c15_i32_58 = arith.constant 15 : i32
    %105 = tpu.dynamic_rotate %104 by %c15_i32_58 dim 0 : vector<16x32xf32>, i32 -> vector<16x32xf32>
    %c15_i32_59 = arith.constant 15 : i32
    %106 = vector.broadcast %c15_i32_59 : i32 to vector<16x32xi32>
    %107 = arith.cmpi sge, %10, %106 : vector<16x32xi32>
    %cst_60 = arith.constant -1.000000e+00 : f32
    %108 = vector.broadcast %cst_60 : f32 to vector<16x32xf32>
    %109 = arith.select %107, %108, %105 : vector<16x32xi1>, vector<16x32xf32>
    %110 = tpu.concatenate %104, %109 in 1 : vector<16x32xf32>, vector<16x32xf32> -> vector<16x64xf32>
    %111 = arith.truncf %110 : vector<16x64xf32> to vector<16x64xbf16>
    %c3 = arith.constant 3 : index
    %c0_61 = arith.constant 0 : index
    %c0_62 = arith.constant 0 : index
    %112 = vector.load %arg4[%c3, %c0_61, %c0_62] : memref<6x64x64xbf16, #tpu.memory_space<vmem>>, vector<1x64x64xbf16>
    %113 = vector.shape_cast %112 : vector<1x64x64xbf16> to vector<64x64xbf16>
    %cst_63 = arith.constant dense<0.000000e+00> : vector<16x64xf32>
    %114 = tpu.matmul %111, %113, %cst_63 {dimension_numbers = #tpu.dot_dimension_numbers<[1], [0], [0], [1], [0, 0, 1, 1], [], []>} : vector<16x64xbf16>, vector<64x64xbf16>, vector<16x64xf32> -> vector<16x64xf32>
    %c3_64 = arith.constant 3 : index
    %c0_65 = arith.constant 0 : index
    %c0_66 = arith.constant 0 : index
    %115 = vector.load %arg5[%c3_64, %c0_65, %c0_66] : memref<6x1x64xf32, #tpu.memory_space<vmem>>, vector<1x1x64xf32>
    %116 = vector.shape_cast %115 : vector<1x1x64xf32> to vector<1x64xf32>
    %117 = vector.broadcast %116 : vector<1x64xf32> to vector<16x64xf32>
    %118 = arith.addf %114, %117 : vector<16x64xf32>
    %119 = math.tanh %118 : vector<16x64xf32>
    %120 = vector.extract_strided_slice %119 {offsets = [0, 0], sizes = [16, 32], strides = [1, 1]} : vector<16x64xf32> to vector<16x32xf32>
    %121 = vector.extract_strided_slice %119 {offsets = [0, 32], sizes = [16, 32], strides = [1, 1]} : vector<16x64xf32> to vector<16x32xf32>
    %cst_67 = arith.constant 5.000000e-01 : f32
    %122 = vector.broadcast %cst_67 : f32 to vector<16x32xf32>
    %123 = arith.mulf %122, %121 : vector<16x32xf32>
    %cst_68 = arith.constant 5.000000e-01 : f32
    %124 = vector.broadcast %cst_68 : f32 to vector<16x32xf32>
    %125 = arith.addf %123, %124 : vector<16x32xf32>
    %126 = arith.mulf %120, %125 : vector<16x32xf32>
    %127 = arith.truncf %126 : vector<16x32xf32> to vector<16x32xbf16>
    %c3_69 = arith.constant 3 : index
    %c0_70 = arith.constant 0 : index
    %c0_71 = arith.constant 0 : index
    %128 = vector.load %arg6[%c3_69, %c0_70, %c0_71] : memref<6x32x32xbf16, #tpu.memory_space<vmem>>, vector<1x32x32xbf16>
    %129 = vector.shape_cast %128 : vector<1x32x32xbf16> to vector<32x32xbf16>
    %cst_72 = arith.constant dense<0.000000e+00> : vector<16x32xf32>
    %130 = tpu.matmul %127, %129, %cst_72 {dimension_numbers = #tpu.dot_dimension_numbers<[1], [0], [0], [1], [0, 0, 1, 1], [], []>} : vector<16x32xbf16>, vector<32x32xbf16>, vector<16x32xf32> -> vector<16x32xf32>
    %131 = arith.addf %104, %130 : vector<16x32xf32>
    %c3_73 = arith.constant 3 : index
    %c0_74 = arith.constant 0 : index
    %c0_75 = arith.constant 0 : index
    %132 = vector.load %arg7[%c3_73, %c0_74, %c0_75] : memref<6x1x32xf32, #tpu.memory_space<vmem>>, vector<1x1x32xf32>
    %133 = vector.shape_cast %132 : vector<1x1x32xf32> to vector<1x32xf32>
    %134 = vector.broadcast %133 : vector<1x32xf32> to vector<16x32xf32>
    %135 = arith.addf %131, %134 : vector<16x32xf32>
    %c14_i32_76 = arith.constant 14 : i32
    %136 = tpu.dynamic_rotate %135 by %c14_i32_76 dim 0 : vector<16x32xf32>, i32 -> vector<16x32xf32>
    %c14_i32_77 = arith.constant 14 : i32
    %137 = vector.broadcast %c14_i32_77 : i32 to vector<16x32xi32>
    %138 = arith.cmpi sge, %10, %137 : vector<16x32xi32>
    %cst_78 = arith.constant -1.000000e+00 : f32
    %139 = vector.broadcast %cst_78 : f32 to vector<16x32xf32>
    %140 = arith.select %138, %139, %136 : vector<16x32xi1>, vector<16x32xf32>
    %141 = tpu.concatenate %135, %140 in 1 : vector<16x32xf32>, vector<16x32xf32> -> vector<16x64xf32>
    %142 = arith.truncf %141 : vector<16x64xf32> to vector<16x64xbf16>
    %c4 = arith.constant 4 : index
    %c0_79 = arith.constant 0 : index
    %c0_80 = arith.constant 0 : index
    %143 = vector.load %arg4[%c4, %c0_79, %c0_80] : memref<6x64x64xbf16, #tpu.memory_space<vmem>>, vector<1x64x64xbf16>
    %144 = vector.shape_cast %143 : vector<1x64x64xbf16> to vector<64x64xbf16>
    %cst_81 = arith.constant dense<0.000000e+00> : vector<16x64xf32>
    %145 = tpu.matmul %142, %144, %cst_81 {dimension_numbers = #tpu.dot_dimension_numbers<[1], [0], [0], [1], [0, 0, 1, 1], [], []>} : vector<16x64xbf16>, vector<64x64xbf16>, vector<16x64xf32> -> vector<16x64xf32>
    %c4_82 = arith.constant 4 : index
    %c0_83 = arith.constant 0 : index
    %c0_84 = arith.constant 0 : index
    %146 = vector.load %arg5[%c4_82, %c0_83, %c0_84] : memref<6x1x64xf32, #tpu.memory_space<vmem>>, vector<1x1x64xf32>
    %147 = vector.shape_cast %146 : vector<1x1x64xf32> to vector<1x64xf32>
    %148 = vector.broadcast %147 : vector<1x64xf32> to vector<16x64xf32>
    %149 = arith.addf %145, %148 : vector<16x64xf32>
    %150 = math.tanh %149 : vector<16x64xf32>
    %151 = vector.extract_strided_slice %150 {offsets = [0, 0], sizes = [16, 32], strides = [1, 1]} : vector<16x64xf32> to vector<16x32xf32>
    %152 = vector.extract_strided_slice %150 {offsets = [0, 32], sizes = [16, 32], strides = [1, 1]} : vector<16x64xf32> to vector<16x32xf32>
    %cst_85 = arith.constant 5.000000e-01 : f32
    %153 = vector.broadcast %cst_85 : f32 to vector<16x32xf32>
    %154 = arith.mulf %153, %152 : vector<16x32xf32>
    %cst_86 = arith.constant 5.000000e-01 : f32
    %155 = vector.broadcast %cst_86 : f32 to vector<16x32xf32>
    %156 = arith.addf %154, %155 : vector<16x32xf32>
    %157 = arith.mulf %151, %156 : vector<16x32xf32>
    %158 = arith.truncf %157 : vector<16x32xf32> to vector<16x32xbf16>
    %c4_87 = arith.constant 4 : index
    %c0_88 = arith.constant 0 : index
    %c0_89 = arith.constant 0 : index
    %159 = vector.load %arg6[%c4_87, %c0_88, %c0_89] : memref<6x32x32xbf16, #tpu.memory_space<vmem>>, vector<1x32x32xbf16>
    %160 = vector.shape_cast %159 : vector<1x32x32xbf16> to vector<32x32xbf16>
    %cst_90 = arith.constant dense<0.000000e+00> : vector<16x32xf32>
    %161 = tpu.matmul %158, %160, %cst_90 {dimension_numbers = #tpu.dot_dimension_numbers<[1], [0], [0], [1], [0, 0, 1, 1], [], []>} : vector<16x32xbf16>, vector<32x32xbf16>, vector<16x32xf32> -> vector<16x32xf32>
    %162 = arith.addf %135, %161 : vector<16x32xf32>
    %c4_91 = arith.constant 4 : index
    %c0_92 = arith.constant 0 : index
    %c0_93 = arith.constant 0 : index
    %163 = vector.load %arg7[%c4_91, %c0_92, %c0_93] : memref<6x1x32xf32, #tpu.memory_space<vmem>>, vector<1x1x32xf32>
    %164 = vector.shape_cast %163 : vector<1x1x32xf32> to vector<1x32xf32>
    %165 = vector.broadcast %164 : vector<1x32xf32> to vector<16x32xf32>
    %166 = arith.addf %162, %165 : vector<16x32xf32>
    %c12_i32_94 = arith.constant 12 : i32
    %167 = tpu.dynamic_rotate %166 by %c12_i32_94 dim 0 : vector<16x32xf32>, i32 -> vector<16x32xf32>
    %c12_i32_95 = arith.constant 12 : i32
    %168 = vector.broadcast %c12_i32_95 : i32 to vector<16x32xi32>
    %169 = arith.cmpi sge, %10, %168 : vector<16x32xi32>
    %cst_96 = arith.constant -1.000000e+00 : f32
    %170 = vector.broadcast %cst_96 : f32 to vector<16x32xf32>
    %171 = arith.select %169, %170, %167 : vector<16x32xi1>, vector<16x32xf32>
    %172 = tpu.concatenate %166, %171 in 1 : vector<16x32xf32>, vector<16x32xf32> -> vector<16x64xf32>
    %173 = arith.truncf %172 : vector<16x64xf32> to vector<16x64xbf16>
    %c5 = arith.constant 5 : index
    %c0_97 = arith.constant 0 : index
    %c0_98 = arith.constant 0 : index
    %174 = vector.load %arg4[%c5, %c0_97, %c0_98] : memref<6x64x64xbf16, #tpu.memory_space<vmem>>, vector<1x64x64xbf16>
    %175 = vector.shape_cast %174 : vector<1x64x64xbf16> to vector<64x64xbf16>
    %cst_99 = arith.constant dense<0.000000e+00> : vector<16x64xf32>
    %176 = tpu.matmul %173, %175, %cst_99 {dimension_numbers = #tpu.dot_dimension_numbers<[1], [0], [0], [1], [0, 0, 1, 1], [], []>} : vector<16x64xbf16>, vector<64x64xbf16>, vector<16x64xf32> -> vector<16x64xf32>
    %c5_100 = arith.constant 5 : index
    %c0_101 = arith.constant 0 : index
    %c0_102 = arith.constant 0 : index
    %177 = vector.load %arg5[%c5_100, %c0_101, %c0_102] : memref<6x1x64xf32, #tpu.memory_space<vmem>>, vector<1x1x64xf32>
    %178 = vector.shape_cast %177 : vector<1x1x64xf32> to vector<1x64xf32>
    %179 = vector.broadcast %178 : vector<1x64xf32> to vector<16x64xf32>
    %180 = arith.addf %176, %179 : vector<16x64xf32>
    %181 = math.tanh %180 : vector<16x64xf32>
    %182 = vector.extract_strided_slice %181 {offsets = [0, 0], sizes = [16, 32], strides = [1, 1]} : vector<16x64xf32> to vector<16x32xf32>
    %183 = vector.extract_strided_slice %181 {offsets = [0, 32], sizes = [16, 32], strides = [1, 1]} : vector<16x64xf32> to vector<16x32xf32>
    %cst_103 = arith.constant 5.000000e-01 : f32
    %184 = vector.broadcast %cst_103 : f32 to vector<16x32xf32>
    %185 = arith.mulf %184, %183 : vector<16x32xf32>
    %cst_104 = arith.constant 5.000000e-01 : f32
    %186 = vector.broadcast %cst_104 : f32 to vector<16x32xf32>
    %187 = arith.addf %185, %186 : vector<16x32xf32>
    %188 = arith.mulf %182, %187 : vector<16x32xf32>
    %189 = tpu.concatenate %33, %64, %95, %126, %157, %188 in 1 : vector<16x32xf32>, vector<16x32xf32>, vector<16x32xf32>, vector<16x32xf32>, vector<16x32xf32>, vector<16x32xf32> -> vector<16x192xf32>
    %190 = arith.truncf %189 : vector<16x192xf32> to vector<16x192xbf16>
    %c0_105 = arith.constant 0 : index
    %c0_106 = arith.constant 0 : index
    %191 = vector.load %arg8[%c0_105, %c0_106] : memref<192x64xbf16, #tpu.memory_space<vmem>>, vector<192x64xbf16>
    %cst_107 = arith.constant dense<0.000000e+00> : vector<16x64xf32>
    %192 = tpu.matmul %190, %191, %cst_107 {dimension_numbers = #tpu.dot_dimension_numbers<[1], [0], [0], [1], [0, 0, 1, 1], [], []>} : vector<16x192xbf16>, vector<192x64xbf16>, vector<16x64xf32> -> vector<16x64xf32>
    %193 = arith.addf %11, %192 : vector<16x64xf32>
    %c0_108 = arith.constant 0 : index
    %c0_109 = arith.constant 0 : index
    %194 = vector.load %arg9[%c0_108, %c0_109] : memref<1x64xf32, #tpu.memory_space<vmem>>, vector<1x64xf32>
    %195 = vector.broadcast %194 : vector<1x64xf32> to vector<16x64xf32>
    %196 = arith.addf %193, %195 : vector<16x64xf32>
    %cst_110 = arith.constant 0.000000e+00 : f32
    %197 = vector.broadcast %cst_110 : f32 to vector<16x64xf32>
    %198 = arith.maximumf %196, %197 : vector<16x64xf32>
    %199 = arith.truncf %198 : vector<16x64xf32> to vector<16x64xbf16>
    %c0_111 = arith.constant 0 : index
    %c0_112 = arith.constant 0 : index
    %200 = vector.load %arg10[%c0_111, %c0_112] : memref<64x64xbf16, #tpu.memory_space<vmem>>, vector<64x64xbf16>
    %cst_113 = arith.constant dense<0.000000e+00> : vector<16x64xf32>
    %201 = tpu.matmul %199, %200, %cst_113 {dimension_numbers = #tpu.dot_dimension_numbers<[1], [0], [0], [1], [0, 0, 1, 1], [], []>} : vector<16x64xbf16>, vector<64x64xbf16>, vector<16x64xf32> -> vector<16x64xf32>
    %c0_114 = arith.constant 0 : index
    %c0_115 = arith.constant 0 : index
    %202 = vector.load %arg11[%c0_114, %c0_115] : memref<1x64xf32, #tpu.memory_space<vmem>>, vector<1x64xf32>
    %203 = vector.broadcast %202 : vector<1x64xf32> to vector<16x64xf32>
    %204 = arith.addf %201, %203 : vector<16x64xf32>
    %cst_116 = arith.constant 0.000000e+00 : f32
    %205 = vector.broadcast %cst_116 : f32 to vector<16x64xf32>
    %206 = arith.maximumf %204, %205 : vector<16x64xf32>
    %207 = arith.truncf %206 : vector<16x64xf32> to vector<16x64xbf16>
    %c0_117 = arith.constant 0 : index
    %c0_118 = arith.constant 0 : index
    %208 = vector.load %arg12[%c0_117, %c0_118] : memref<64x128xbf16, #tpu.memory_space<vmem>>, vector<64x128xbf16>
    %cst_119 = arith.constant dense<0.000000e+00> : vector<16x128xf32>
    %209 = tpu.matmul %207, %208, %cst_119 {dimension_numbers = #tpu.dot_dimension_numbers<[1], [0], [0], [1], [0, 0, 1, 1], [], []>} : vector<16x64xbf16>, vector<64x128xbf16>, vector<16x128xf32> -> vector<16x128xf32>
    %c0_120 = arith.constant 0 : index
    %c0_121 = arith.constant 0 : index
    %210 = vector.load %arg13[%c0_120, %c0_121] : memref<1x128xf32, #tpu.memory_space<vmem>>, vector<1x128xf32>
    %211 = vector.broadcast %210 : vector<1x128xf32> to vector<16x128xf32>
    %212 = arith.addf %209, %211 : vector<16x128xf32>
    %213 = vector.shape_cast %212 : vector<16x128xf32> to vector<1x16x128xf32>
    %c0_122 = arith.constant 0 : index
    %c0_123 = arith.constant 0 : index
    %c0_124 = arith.constant 0 : index
    %214 = vector.load %arg14[%c0_122, %c0_123, %c0_124] : memref<1x16x128xf32, #tpu.memory_space<vmem>>, vector<1x16x128xf32>
    tpu.vector_store %arg14[%c0_122, %c0_123, %c0_124], %213 {strides = array<i32>} : memref<1x16x128xf32, #tpu.memory_space<vmem>>, vector<1x16x128xf32>,
    return
  }
  func.func @transform_0(%arg0: i32) -> (i32, i32, i32) {
    %c0_i32 = arith.constant 0 : i32
    %c0_i32_0 = arith.constant 0 : i32
    %c0_i32_1 = arith.constant 0 : i32
    return %arg0, %c0_i32, %c0_i32_0 : i32, i32, i32
  }
  func.func @transform_1(%arg0: i32) -> (i32, i32) {
    %c0_i32 = arith.constant 0 : i32
    %c0_i32_0 = arith.constant 0 : i32
    %c0_i32_1 = arith.constant 0 : i32
    return %c0_i32, %c0_i32_0 : i32, i32
  }
  func.func @transform_2(%arg0: i32) -> (i32, i32) {
    %c0_i32 = arith.constant 0 : i32
    %c0_i32_0 = arith.constant 0 : i32
    %c0_i32_1 = arith.constant 0 : i32
    return %c0_i32, %c0_i32_0 : i32, i32
  }
  func.func @transform_3(%arg0: i32) -> (i32, i32, i32) {
    %c0_i32 = arith.constant 0 : i32
    %c0_i32_0 = arith.constant 0 : i32
    %c0_i32_1 = arith.constant 0 : i32
    %c0_i32_2 = arith.constant 0 : i32
    return %c0_i32, %c0_i32_0, %c0_i32_1 : i32, i32, i32
  }
  func.func @transform_4(%arg0: i32) -> (i32, i32, i32) {
    %c0_i32 = arith.constant 0 : i32
    %c0_i32_0 = arith.constant 0 : i32
    %c0_i32_1 = arith.constant 0 : i32
    %c0_i32_2 = arith.constant 0 : i32
    return %c0_i32, %c0_i32_0, %c0_i32_1 : i32, i32, i32
  }
  func.func @transform_5(%arg0: i32) -> (i32, i32, i32) {
    %c0_i32 = arith.constant 0 : i32
    %c0_i32_0 = arith.constant 0 : i32
    %c0_i32_1 = arith.constant 0 : i32
    %c0_i32_2 = arith.constant 0 : i32
    return %c0_i32, %c0_i32_0, %c0_i32_1 : i32, i32, i32
  }
  func.func @transform_6(%arg0: i32) -> (i32, i32, i32) {
    %c0_i32 = arith.constant 0 : i32
    %c0_i32_0 = arith.constant 0 : i32
    %c0_i32_1 = arith.constant 0 : i32
    %c0_i32_2 = arith.constant 0 : i32
    return %c0_i32, %c0_i32_0, %c0_i32_1 : i32, i32, i32
  }
  func.func @transform_7(%arg0: i32) -> (i32, i32) {
    %c0_i32 = arith.constant 0 : i32
    %c0_i32_0 = arith.constant 0 : i32
    %c0_i32_1 = arith.constant 0 : i32
    return %c0_i32, %c0_i32_0 : i32, i32
  }
  func.func @transform_8(%arg0: i32) -> (i32, i32) {
    %c0_i32 = arith.constant 0 : i32
    %c0_i32_0 = arith.constant 0 : i32
    %c0_i32_1 = arith.constant 0 : i32
    return %c0_i32, %c0_i32_0 : i32, i32
  }
  func.func @transform_9(%arg0: i32) -> (i32, i32) {
    %c0_i32 = arith.constant 0 : i32
    %c0_i32_0 = arith.constant 0 : i32
    %c0_i32_1 = arith.constant 0 : i32
    return %c0_i32, %c0_i32_0 : i32, i32
  }
  func.func @transform_10(%arg0: i32) -> (i32, i32) {
    %c0_i32 = arith.constant 0 : i32
    %c0_i32_0 = arith.constant 0 : i32
    %c0_i32_1 = arith.constant 0 : i32
    return %c0_i32, %c0_i32_0 : i32, i32
  }
  func.func @transform_11(%arg0: i32) -> (i32, i32) {
    %c0_i32 = arith.constant 0 : i32
    %c0_i32_0 = arith.constant 0 : i32
    %c0_i32_1 = arith.constant 0 : i32
    return %c0_i32, %c0_i32_0 : i32, i32
  }
  func.func @transform_12(%arg0: i32) -> (i32, i32) {
    %c0_i32 = arith.constant 0 : i32
    %c0_i32_0 = arith.constant 0 : i32
    %c0_i32_1 = arith.constant 0 : i32
    return %c0_i32, %c0_i32_0 : i32, i32
  }
  func.func @transform_13(%arg0: i32) -> (i32, i32, i32) {
    %c0_i32 = arith.constant 0 : i32
    %c0_i32_0 = arith.constant 0 : i32
    %c0_i32_1 = arith.constant 0 : i32
    return %arg0, %c0_i32, %c0_i32_0 : i32, i32, i32
  }
}

</mosaic_0001>

<llo_original>
// kernel: tpu_custom_call.1
$region0: #{tpu_custom_call.1}
  #allocation0 [shape = 'u32[]', space=smem, size = 0x4, offset = 0x4, fixed_abs, tag = 'smem constant byte address 0x4 - core index']
  #allocation1 [shape = 'u32[144,128]{1,0:T(1,128)}', space=vmem, size = 0x12000, scoped, tag = 'internal scratch']
  %s0 = inlined_call_operand.vmem [shape: f32[2,16,1], index: 0, kind: input, shape index: {}]
  %s1 = inlined_call_operand.hbm [shape: f32[1,32], index: 1, kind: input, shape index: {}]
  %s2 = inlined_call_operand.hbm [shape: f32[1,32], index: 2, kind: input, shape index: {}]
  %s3 = inlined_call_operand.vmem [shape: bf16[6,64,64], index: 3, kind: input, shape index: {}]
  %s4 = inlined_call_operand.vmem [shape: f32[6,1,64], index: 4, kind: input, shape index: {}]
  %s5 = inlined_call_operand.hbm [shape: bf16[6,32,32], index: 5, kind: input, shape index: {}]
  %s6 = inlined_call_operand.vmem [shape: f32[6,1,32], index: 6, kind: input, shape index: {}]
  %s7 = inlined_call_operand.vmem [shape: bf16[192,64], index: 7, kind: input, shape index: {}]
  %s8 = inlined_call_operand.vmem [shape: f32[1,64], index: 8, kind: input, shape index: {}]
  %s9 = inlined_call_operand.hbm [shape: bf16[64,64], index: 9, kind: input, shape index: {}]
  %s10 = inlined_call_operand.vmem [shape: f32[1,64], index: 10, kind: input, shape index: {}]
  %s11 = inlined_call_operand.hbm [shape: bf16[64,128], index: 11, kind: input, shape index: {}]
  %s12 = inlined_call_operand.vmem [shape: f32[1,128], index: 12, kind: input, shape index: {}]
  %s13 = inlined_call_operand.hbm [shape: f32[2,16,128], index: 13, kind: output, shape index: {}]
  %s14 = sld [smem:[#allocation0]]
  $region105: #{tpu_custom_call.1} parent=0
    _
  %s16 = ssub.s32 1, %s14
  %s17 = scalar_select 0, %s16, %s14
  $region1: #{tpu_custom_call.1} parent=0
    #allocation2 [shape = 'u8[512]{0}', space=vmem, size = 0x400, scoped, tag = 'input window, operand 1, single buffered']
    #allocation3 [shape = 's32[2]{0}', space=sflag, size = 0x8, scoped, tag = 'scoped memory for tpu_custom_call.1']
    #allocation4 [shape = 's32[2]{0}', space=sflag, size = 0x8, scoped, tag = 'scoped memory for tpu_custom_call.1']
    #allocation5 [shape = 'u8[512]{0}', space=vmem, size = 0x400, scoped, tag = 'input window, operand 2, single buffered']
    #allocation6 [shape = 's32[1]{0}', space=sflag, size = 0x4, scoped, tag = 'scoped memory for tpu_custom_call.1']
    #allocation7 [shape = 'u8[49152]{0}', space=vmem, size = 0xc000, scoped, tag = 'input window, operand 5, single buffered']
    #allocation8 [shape = 'u8[16384]{0}', space=vmem, size = 0x4000, scoped, tag = 'input window, operand 9, single buffered']
    #allocation9 [shape = 's32[1]{0}', space=sflag, size = 0x4, scoped, tag = 'scoped memory for tpu_custom_call.1']
    #allocation10 [shape = 'u8[16384]{0}', space=vmem, size = 0x4000, scoped, tag = 'input window, operand 11, single buffered']
    #allocation11 [shape = 'u8[16384]{0}', space=vmem, size = 0x4000, scoped, tag = 'output window, operand 0']
    %18 = vsyncpa [#allocation3], 0
    %19 = vsyncpa [#allocation6], 0
    %20 = vsyncpa [#allocation9], 0
    %21 = vsyncpa [#allocation4], 0
    %s22 = scalar_lea.sflag [#allocation4], 1
    %23 = vsyncpa %s22, 0
    loop: start=0, step=1, limit=4
    $region2: #{tpu_custom_call.1} parent=1 // loop_pre_header
      _
    $region3: #{tpu_custom_call.1} parent=1 // loop_header
      %s25 = sphi 0, %s29
      %p26 = scmp.ge.s32.totalorder %s25, 4
      %s35 = sphi 0, %s37
      %s38 = sphi 0, %s35
      %s39 = sphi 0, %s38
      %s55 = sphi 0, %s39
      %s59 = sphi 0, %s59
      %s61 = sphi 0, %s59
      %s62 = sphi 0, %s61
      %s76 = sphi 0, %s62
      %s80 = sphi 0, %s80
      %s82 = sphi 0, %s80
      %s83 = sphi 0, %s82
      %s97 = sphi 0, %s83
      %s101 = sphi 0, %s101
      %s103 = sphi 0, %s101
      %s104 = sphi 0, %s103
      %s118 = sphi 0, %s104
      %s122 = sphi 0, %s122
      %s124 = sphi 0, %s122
      %s125 = sphi 0, %s124
      %s139 = sphi 0, %s125
      %s143 = sphi 0, %s143
      %s145 = sphi 0, %s143
      %s146 = sphi 0, %s145
      %s160 = sphi 0, %s146
      %s164 = sphi 0, %s164
      %s166 = sphi 0, %s164
      %s167 = sphi 0, %s166
      %s181 = sphi 0, %s167
      %s185 = sphi 0, %s185
      %s187 = sphi 0, %s185
      %s188 = sphi 0, %s187
      %s202 = sphi 0, %s188
      %s206 = sphi 0, %s206
      %s208 = sphi 0, %s206
      %s209 = sphi 0, %s208
      %s223 = sphi 0, %s209
      %s227 = sphi 0, %s227
      %s229 = sphi 0, %s227
      %s230 = sphi 0, %s229
      %s244 = sphi 0, %s230
      %s248 = sphi 0, %s248
      %s250 = sphi 0, %s248
      %s251 = sphi 0, %s250
      %s265 = sphi 0, %s251
      %s269 = sphi 0, %s269
      %s271 = sphi 0, %s269
      %s272 = sphi 0, %s271
      %s286 = sphi 0, %s272
      %s290 = sphi 0, %s290
      %s292 = sphi 0, %s290
      %s293 = sphi 0, %s292
      %s307 = sphi 0, %s293
      %s313 = sphi 0, %s315
      %s316 = sphi 0, %s313
      %s317 = sphi 0, %s316
      %s333 = sphi 0, %s317
    $region4: #{tpu_custom_call.1} parent=1 // loop_header_branch
      %28 = sbr.rel (%p26) target = $region8
    $region5: #{tpu_custom_call.1} parent=1 // loop_body
      %s30 = ssub.s32 %s25, 1
      %s31 = ssub.s32 %s25, 2
      %s32 = sadd.s32 %s25, 1
      %s33 = ssub.s32 %s25, %s32
      %p34 = scmp.eq.s32.totalorder %s33, 0
      %s36 = sadd.s32 %s35, 1
      %s37 = scalar_select %p34, %s35, %s36
      %p40 = pneg %p34
      %p41 = scmp.eq.s32.totalorder %s25, 1
      %p42 = por %p40, %p41
      %p43 = scmp.ne.s32.totalorder %s35, %s38
      %p44 = scmp.eq.s32.totalorder %s25, 0
      %p45 = por %p43, %p44
      %p46 = scmp.ne.s32.totalorder %s35, %s38
      %p47 = scmp.eq.s32.totalorder %s30, 1
      %p48 = por %p46, %p47
      %p49 = scmp.ne.s32.totalorder %s38, %s39
      %p50 = scmp.eq.s32.totalorder %s30, 0
      %p51 = por %p49, %p50
      %p52 = scmp.ne.s32.totalorder %s38, %s39
      %p53 = scmp.eq.s32.totalorder %s31, 1
      %p54 = por %p52, %p53
      %p56 = scmp.ne.s32.totalorder %s39, %s55
      %p57 = scmp.eq.s32.totalorder %s31, 0
      %p58 = por %p56, %p57
      %s60 = sadd.s32 %s59, 1
      %p63 = scmp.eq.s32.totalorder %s25, 1
      %p64 = scmp.ne.s32.totalorder %s59, %s61
      %p65 = scmp.eq.s32.totalorder %s25, 0
      %p66 = por %p64, %p65
      %p67 = scmp.ne.s32.totalorder %s59, %s61
      %p68 = scmp.eq.s32.totalorder %s30, 1
      %p69 = por %p67, %p68
      %p70 = scmp.ne.s32.totalorder %s61, %s62
      %p71 = scmp.eq.s32.totalorder %s30, 0
      %p72 = por %p70, %p71
      %p73 = scmp.ne.s32.totalorder %s61, %s62
      %p74 = scmp.eq.s32.totalorder %s31, 1
      %p75 = por %p73, %p74
      %p77 = scmp.ne.s32.totalorder %s62, %s76
      %p78 = scmp.eq.s32.totalorder %s31, 0
      %p79 = por %p77, %p78
      %s81 = sadd.s32 %s80, 1
      %p84 = scmp.eq.s32.totalorder %s25, 1
      %p85 = scmp.ne.s32.totalorder %s80, %s82
      %p86 = scmp.eq.s32.totalorder %s25, 0
      %p87 = por %p85, %p86
      %p88 = scmp.ne.s32.totalorder %s80, %s82
      %p89 = scmp.eq.s32.totalorder %s30, 1
      %p90 = por %p88, %p89
      %p91 = scmp.ne.s32.totalorder %s82, %s83
      %p92 = scmp.eq.s32.totalorder %s30, 0
      %p93 = por %p91, %p92
      %p94 = scmp.ne.s32.totalorder %s82, %s83
      %p95 = scmp.eq.s32.totalorder %s31, 1
      %p96 = por %p94, %p95
      %p98 = scmp.ne.s32.totalorder %s83, %s97
      %p99 = scmp.eq.s32.totalorder %s31, 0
      %p100 = por %p98, %p99
      %s102 = sadd.s32 %s101, 1
      %p105 = scmp.eq.s32.totalorder %s25, 1
      %p106 = scmp.ne.s32.totalorder %s101, %s103
      %p107 = scmp.eq.s32.totalorder %s25, 0
      %p108 = por %p106, %p107
      %p109 = scmp.ne.s32.totalorder %s101, %s103
      %p110 = scmp.eq.s32.totalorder %s30, 1
      %p111 = por %p109, %p110
      %p112 = scmp.ne.s32.totalorder %s103, %s104
      %p113 = scmp.eq.s32.totalorder %s30, 0
      %p114 = por %p112, %p113
      %p115 = scmp.ne.s32.totalorder %s103, %s104
      %p116 = scmp.eq.s32.totalorder %s31, 1
      %p117 = por %p115, %p116
      %p119 = scmp.ne.s32.totalorder %s104, %s118
      %p120 = scmp.eq.s32.totalorder %s31, 0
      %p121 = por %p119, %p120
      %s123 = sadd.s32 %s122, 1
      %p126 = scmp.eq.s32.totalorder %s25, 1
      %p127 = scmp.ne.s32.totalorder %s122, %s124
      %p128 = scmp.eq.s32.totalorder %s25, 0
      %p129 = por %p127, %p128
      %p130 = scmp.ne.s32.totalorder %s122, %s124
      %p131 = scmp.eq.s32.totalorder %s30, 1
      %p132 = por %p130, %p131
      %p133 = scmp.ne.s32.totalorder %s124, %s125
      %p134 = scmp.eq.s32.totalorder %s30, 0
      %p135 = por %p133, %p134
      %p136 = scmp.ne.s32.totalorder %s124, %s125
      %p137 = scmp.eq.s32.totalorder %s31, 1
      %p138 = por %p136, %p137
      %p140 = scmp.ne.s32.totalorder %s125, %s139
      %p141 = scmp.eq.s32.totalorder %s31, 0
      %p142 = por %p140, %p141
      %s144 = sadd.s32 %s143, 1
      %p147 = scmp.eq.s32.totalorder %s25, 1
      %p148 = scmp.ne.s32.totalorder %s143, %s145
      %p149 = scmp.eq.s32.totalorder %s25, 0
      %p150 = por %p148, %p149
      %p151 = scmp.ne.s32.totalorder %s143, %s145
      %p152 = scmp.eq.s32.totalorder %s30, 1
      %p153 = por %p151, %p152
      %p154 = scmp.ne.s32.totalorder %s145, %s146
      %p155 = scmp.eq.s32.totalorder %s30, 0
      %p156 = por %p154, %p155
      %p157 = scmp.ne.s32.totalorder %s145, %s146
      %p158 = scmp.eq.s32.totalorder %s31, 1
      %p159 = por %p157, %p158
      %p161 = scmp.ne.s32.totalorder %s146, %s160
      %p162 = scmp.eq.s32.totalorder %s31, 0
      %p163 = por %p161, %p162
      %s165 = sadd.s32 %s164, 1
      %p168 = scmp.eq.s32.totalorder %s25, 1
      %p169 = scmp.ne.s32.totalorder %s164, %s166
      %p170 = scmp.eq.s32.totalorder %s25, 0
      %p171 = por %p169, %p170
      %p172 = scmp.ne.s32.totalorder %s164, %s166
      %p173 = scmp.eq.s32.totalorder %s30, 1
      %p174 = por %p172, %p173
      %p175 = scmp.ne.s32.totalorder %s166, %s167
      %p176 = scmp.eq.s32.totalorder %s30, 0
      %p177 = por %p175, %p176
      %p178 = scmp.ne.s32.totalorder %s166, %s167
      %p179 = scmp.eq.s32.totalorder %s31, 1
      %p180 = por %p178, %p179
      %p182 = scmp.ne.s32.totalorder %s167, %s181
      %p183 = scmp.eq.s32.totalorder %s31, 0
      %p184 = por %p182, %p183
      %s186 = sadd.s32 %s185, 1
      %p189 = scmp.eq.s32.totalorder %s25, 1
      %p190 = scmp.ne.s32.totalorder %s185, %s187
      %p191 = scmp.eq.s32.totalorder %s25, 0
      %p192 = por %p190, %p191
      %p193 = scmp.ne.s32.totalorder %s185, %s187
      %p194 = scmp.eq.s32.totalorder %s30, 1
      %p195 = por %p193, %p194
      %p196 = scmp.ne.s32.totalorder %s187, %s188
      %p197 = scmp.eq.s32.totalorder %s30, 0
      %p198 = por %p196, %p197
      %p199 = scmp.ne.s32.totalorder %s187, %s188
      %p200 = scmp.eq.s32.totalorder %s31, 1
      %p201 = por %p199, %p200
      %p203 = scmp.ne.s32.totalorder %s188, %s202
      %p204 = scmp.eq.s32.totalorder %s31, 0
      %p205 = por %p203, %p204
      %s207 = sadd.s32 %s206, 1
      %p210 = scmp.eq.s32.totalorder %s25, 1
      %p211 = scmp.ne.s32.totalorder %s206, %s208
      %p212 = scmp.eq.s32.totalorder %s25, 0
      %p213 = por %p211, %p212
      %p214 = scmp.ne.s32.totalorder %s206, %s208
      %p215 = scmp.eq.s32.totalorder %s30, 1
      %p216 = por %p214, %p215
      %p217 = scmp.ne.s32.totalorder %s208, %s209
      %p218 = scmp.eq.s32.totalorder %s30, 0
      %p219 = por %p217, %p218
      %p220 = scmp.ne.s32.totalorder %s208, %s209
      %p221 = scmp.eq.s32.totalorder %s31, 1
      %p222 = por %p220, %p221
      %p224 = scmp.ne.s32.totalorder %s209, %s223
      %p225 = scmp.eq.s32.totalorder %s31, 0
      %p226 = por %p224, %p225
      %s228 = sadd.s32 %s227, 1
      %p231 = scmp.eq.s32.totalorder %s25, 1
      %p232 = scmp.ne.s32.totalorder %s227, %s229
      %p233 = scmp.eq.s32.totalorder %s25, 0
      %p234 = por %p232, %p233
      %p235 = scmp.ne.s32.totalorder %s227, %s229
      %p236 = scmp.eq.s32.totalorder %s30, 1
      %p237 = por %p235, %p236
      %p238 = scmp.ne.s32.totalorder %s229, %s230
      %p239 = scmp.eq.s32.totalorder %s30, 0
      %p240 = por %p238, %p239
      %p241 = scmp.ne.s32.totalorder %s229, %s230
      %p242 = scmp.eq.s32.totalorder %s31, 1
      %p243 = por %p241, %p242
      %p245 = scmp.ne.s32.totalorder %s230, %s244
      %p246 = scmp.eq.s32.totalorder %s31, 0
      %p247 = por %p245, %p246
      %s249 = sadd.s32 %s248, 1
      %p252 = scmp.eq.s32.totalorder %s25, 1
      %p253 = scmp.ne.s32.totalorder %s248, %s250
      %p254 = scmp.eq.s32.totalorder %s25, 0
      %p255 = por %p253, %p254
      %p256 = scmp.ne.s32.totalorder %s248, %s250
      %p257 = scmp.eq.s32.totalorder %s30, 1
      %p258 = por %p256, %p257
      %p259 = scmp.ne.s32.totalorder %s250, %s251
      %p260 = scmp.eq.s32.totalorder %s30, 0
      %p261 = por %p259, %p260
      %p262 = scmp.ne.s32.totalorder %s250, %s251
      %p263 = scmp.eq.s32.totalorder %s31, 1
      %p264 = por %p262, %p263
      %p266 = scmp.ne.s32.totalorder %s251, %s265
      %p267 = scmp.eq.s32.totalorder %s31, 0
      %p268 = por %p266, %p267
      %s270 = sadd.s32 %s269, 1
      %p273 = scmp.eq.s32.totalorder %s25, 1
      %p274 = scmp.ne.s32.totalorder %s269, %s271
      %p275 = scmp.eq.s32.totalorder %s25, 0
      %p276 = por %p274, %p275
      %p277 = scmp.ne.s32.totalorder %s269, %s271
      %p278 = scmp.eq.s32.totalorder %s30, 1
      %p279 = por %p277, %p278
      %p280 = scmp.ne.s32.totalorder %s271, %s272
      %p281 = scmp.eq.s32.totalorder %s30, 0
      %p282 = por %p280, %p281
      %p283 = scmp.ne.s32.totalorder %s271, %s272
      %p284 = scmp.eq.s32.totalorder %s31, 1
      %p285 = por %p283, %p284
      %p287 = scmp.ne.s32.totalorder %s272, %s286
      %p288 = scmp.eq.s32.totalorder %s31, 0
      %p289 = por %p287, %p288
      %s291 = sadd.s32 %s290, 1
      %p294 = scmp.eq.s32.totalorder %s25, 1
      %p295 = scmp.ne.s32.totalorder %s290, %s292
      %p296 = scmp.eq.s32.totalorder %s25, 0
      %p297 = por %p295, %p296
      %p298 = scmp.ne.s32.totalorder %s290, %s292
      %p299 = scmp.eq.s32.totalorder %s30, 1
      %p300 = por %p298, %p299
      %p301 = scmp.ne.s32.totalorder %s292, %s293
      %p302 = scmp.eq.s32.totalorder %s30, 0
      %p303 = por %p301, %p302
      %p304 = scmp.ne.s32.totalorder %s292, %s293
      %p305 = scmp.eq.s32.totalorder %s31, 1
      %p306 = por %p304, %p305
      %p308 = scmp.ne.s32.totalorder %s293, %s307
      %p309 = scmp.eq.s32.totalorder %s31, 0
      %p310 = por %p308, %p309
      %s311 = ssub.s32 %s25, %s32
      %p312 = scmp.eq.s32.totalorder %s311, 0
      %s314 = sadd.s32 %s313, 1
      %s315 = scalar_select %p312, %s313, %s314
      %p318 = pneg %p312
      %p319 = scmp.eq.s32.totalorder %s25, 1
      %p320 = por %p318, %p319
      %p321 = scmp.ne.s32.totalorder %s313, %s316
      %p322 = scmp.eq.s32.totalorder %s25, 0
      %p323 = por %p321, %p322
      %p324 = scmp.ne.s32.totalorder %s313, %s316
      %p325 = scmp.eq.s32.totalorder %s30, 1
      %p326 = por %p324, %p325
      %p327 = scmp.ne.s32.totalorder %s316, %s317
      %p328 = scmp.eq.s32.totalorder %s30, 0
      %p329 = por %p327, %p328
      %p330 = scmp.ne.s32.totalorder %s316, %s317
      %p331 = scmp.eq.s32.totalorder %s31, 1
      %p332 = por %p330, %p331
      %p334 = scmp.ne.s32.totalorder %s317, %s333
      %p335 = scmp.eq.s32.totalorder %s31, 0
      %p336 = por %p334, %p335
      %p337 = scmp.le.s32.totalorder 1, %s25
      %p338 = scmp.lt.s32.totalorder %s25, 3
      %p339 = pnand %p337, %p338
      %p340 = pneg %p339
      // Predicated region
      $region9: #{tpu_custom_call.1} parent=5 // pred_check
        _
      $region10: #{tpu_custom_call.1} parent=5 // pred_check_branch
        %342 = sbr.rel (%p339) target = $region12
      $region11: #{tpu_custom_call.1} parent=5 // pred_region
        %s343 = ssub.s32 %s25, 1
        // Predicated region
        $region13: #{tpu_custom_call.1} parent=11 // pred_check
          %p344 = pneg %p72
        $region14: #{tpu_custom_call.1} parent=11 // pred_check_branch
          %346 = sbr.rel (%p344) target = $region16
        $region15: #{tpu_custom_call.1} parent=11 // pred_region
          %s348 = ssub.s32 16, 16
          %349 = vsyncadd [#allocation3], %s348
          %s351 = sshll.u32 [#allocation2], 4
          %s352 = int_to_ptr.vmem [resolvable:$true] %s351
          %354 = dma.hbm_to_vmem [thread:$0]  %s1, 16, %s352, [#allocation3]
        $region16: #{tpu_custom_call.1} parent=11 // pred_fallthru
          _
        // Predicated region
        $region17: #{tpu_custom_call.1} parent=11 // pred_check
          %p355 = pneg %p93
        $region18: #{tpu_custom_call.1} parent=11 // pred_check_branch
          %357 = sbr.rel (%p355) target = $region20
        $region19: #{tpu_custom_call.1} parent=11 // pred_region
          %s359 = ssub.s32 16, 16
          %360 = vsyncadd [#allocation6], %s359
          %s362 = sshll.u32 [#allocation5], 4
          %s363 = int_to_ptr.vmem [resolvable:$true] %s362
          %365 = dma.hbm_to_vmem [thread:$0]  %s2, 16, %s363, [#allocation6]
        $region20: #{tpu_custom_call.1} parent=11 // pred_fallthru
          _
        // Predicated region
        $region21: #{tpu_custom_call.1} parent=11 // pred_check
          %p366 = pneg %p114
        $region22: #{tpu_custom_call.1} parent=11 // pred_check_branch
          %368 = sbr.rel (%p366) target = $region24
        $region23: #{tpu_custom_call.1} parent=11 // pred_region
          _
        $region24: #{tpu_custom_call.1} parent=11 // pred_fallthru
          _
        // Predicated region
        $region25: #{tpu_custom_call.1} parent=11 // pred_check
          %p369 = pneg %p135
        $region26: #{tpu_custom_call.1} parent=11 // pred_check_branch
          %371 = sbr.rel (%p369) target = $region28
        $region27: #{tpu_custom_call.1} parent=11 // pred_region
          _
        $region28: #{tpu_custom_call.1} parent=11 // pred_fallthru
          _
        // Predicated region
        $region29: #{tpu_custom_call.1} parent=11 // pred_check
          %p372 = pneg %p156
        $region30: #{tpu_custom_call.1} parent=11 // pred_check_branch
          %374 = sbr.rel (%p372) target = $region32
        $region31: #{tpu_custom_call.1} parent=11 // pred_region
          %s376 = ssub.s32 1536, 1536
          %377 = vsyncadd [#allocation6], %s376
          %s378 = sshll.u32 [#allocation7], 4
          %s379 = int_to_ptr.vmem [resolvable:$true] %s378
          %384 = dma.hbm_to_vmem [thread:$0]  %s5, 1536, %s379, [#allocation6], 64, 64, 4
        $region32: #{tpu_custom_call.1} parent=11 // pred_fallthru
          _
        // Predicated region
        $region33: #{tpu_custom_call.1} parent=11 // pred_check
          %p385 = pneg %p177
        $region34: #{tpu_custom_call.1} parent=11 // pred_check_branch
          %387 = sbr.rel (%p385) target = $region36
        $region35: #{tpu_custom_call.1} parent=11 // pred_region
          _
        $region36: #{tpu_custom_call.1} parent=11 // pred_fallthru
          _
        // Predicated region
        $region37: #{tpu_custom_call.1} parent=11 // pred_check
          %p388 = pneg %p198
        $region38: #{tpu_custom_call.1} parent=11 // pred_check_branch
          %390 = sbr.rel (%p388) target = $region40
        $region39: #{tpu_custom_call.1} parent=11 // pred_region
          _
        $region40: #{tpu_custom_call.1} parent=11 // pred_fallthru
          _
        // Predicated region
        $region41: #{tpu_custom_call.1} parent=11 // pred_check
          %p391 = pneg %p219
        $region42: #{tpu_custom_call.1} parent=11 // pred_check_branch
          %393 = sbr.rel (%p391) target = $region44
        $region43: #{tpu_custom_call.1} parent=11 // pred_region
          _
        $region44: #{tpu_custom_call.1} parent=11 // pred_fallthru
          _
        // Predicated region
        $region45: #{tpu_custom_call.1} parent=11 // pred_check
          %p394 = pneg %p240
        $region46: #{tpu_custom_call.1} parent=11 // pred_check_branch
          %396 = sbr.rel (%p394) target = $region48
        $region47: #{tpu_custom_call.1} parent=11 // pred_region
          %s398 = ssub.s32 512, 512
          %399 = vsyncadd [#allocation9], %s398
          %s400 = sshll.u32 [#allocation8], 4
          %s401 = int_to_ptr.vmem [resolvable:$true] %s400
          %406 = dma.hbm_to_vmem [thread:$0]  %s9, 512, %s401, [#allocation9], 64, 64, 4
        $region48: #{tpu_custom_call.1} parent=11 // pred_fallthru
          _
        // Predicated region
        $region49: #{tpu_custom_call.1} parent=11 // pred_check
          %p407 = pneg %p261
        $region50: #{tpu_custom_call.1} parent=11 // pred_check_branch
          %409 = sbr.rel (%p407) target = $region52
        $region51: #{tpu_custom_call.1} parent=11 // pred_region
          _
        $region52: #{tpu_custom_call.1} parent=11 // pred_fallthru
          _
        // Predicated region
        $region53: #{tpu_custom_call.1} parent=11 // pred_check
          %p410 = pneg %p282
        $region54: #{tpu_custom_call.1} parent=11 // pred_check_branch
          %412 = sbr.rel (%p410) target = $region56
        $region55: #{tpu_custom_call.1} parent=11 // pred_region
          %s414 = ssub.s32 512, 512
          %415 = vsyncadd [#allocation9], %s414
          %s416 = sshll.u32 [#allocation10], 4
          %s417 = int_to_ptr.vmem [resolvable:$true] %s416
          %422 = dma.hbm_to_vmem [thread:$0]  %s11, 512, %s417, [#allocation9], 64, 64, 4
        $region56: #{tpu_custom_call.1} parent=11 // pred_fallthru
          _
        // Predicated region
        $region57: #{tpu_custom_call.1} parent=11 // pred_check
          %p423 = pneg %p303
        $region58: #{tpu_custom_call.1} parent=11 // pred_check_branch
          %425 = sbr.rel (%p423) target = $region60
        $region59: #{tpu_custom_call.1} parent=11 // pred_region
          _
        $region60: #{tpu_custom_call.1} parent=11 // pred_fallthru
          _
      $region12: #{tpu_custom_call.1} parent=5 // pred_fallthru
        _
      %p426 = scmp.lt.s32.totalorder %s25, 2
      // Predicated region
      $region61: #{tpu_custom_call.1} parent=5 // pred_check
        %p427 = pneg %p426
      $region62: #{tpu_custom_call.1} parent=5 // pred_check_branch
        %429 = sbr.rel (%p427) target = $region64
      $region63: #{tpu_custom_call.1} parent=5 // pred_region
        // Predicated region
        $region65: #{tpu_custom_call.1} parent=63 // pred_check
          %p430 = pneg %p45
        $region66: #{tpu_custom_call.1} parent=63 // pred_check_branch
          %432 = sbr.rel (%p430) target = $region68
        $region67: #{tpu_custom_call.1} parent=63 // pred_region
          %p433 = scmp.lt.s32.totalorder %s25, 1
          %s434 = scalar_select %p433, %s25, 1
          %s435 = smul.addr %s434, 2
          %s436 = smul.addr %s435, 8
          %s437 = scalar_lea.vmem %s0, %s436
        $region68: #{tpu_custom_call.1} parent=63 // pred_fallthru
          _
      $region64: #{tpu_custom_call.1} parent=5 // pred_fallthru
        _
      %p438 = scmp.le.s32.totalorder 1, %s25
      %p439 = scmp.lt.s32.totalorder %s25, 3
      %p440 = pnand %p438, %p439
      %p441 = pneg %p440
      // Predicated region
      $region69: #{tpu_custom_call.1} parent=5 // pred_check
        _
      $region70: #{tpu_custom_call.1} parent=5 // pred_check_branch
        %443 = sbr.rel (%p440) target = $region72
      $region71: #{tpu_custom_call.1} parent=5 // pred_region
        %s444 = ssub.s32 %s25, 1
        // Predicated region
        $region73: #{tpu_custom_call.1} parent=71 // pred_check
          %p445 = pneg %p72
        $region74: #{tpu_custom_call.1} parent=71 // pred_check_branch
          %447 = sbr.rel (%p445) target = $region76
        $region75: #{tpu_custom_call.1} parent=71 // pred_region
          %448 = dma.done [#allocation3], 16
        $region76: #{tpu_custom_call.1} parent=71 // pred_fallthru
          _
        // Predicated region
        $region77: #{tpu_custom_call.1} parent=71 // pred_check
          %p449 = pneg %p93
        $region78: #{tpu_custom_call.1} parent=71 // pred_check_branch
          %451 = sbr.rel (%p449) target = $region80
        $region79: #{tpu_custom_call.1} parent=71 // pred_region
          %452 = dma.done [#allocation6], 16
        $region80: #{tpu_custom_call.1} parent=71 // pred_fallthru
          _
        // Predicated region
        $region81: #{tpu_custom_call.1} parent=71 // pred_check
          %p453 = pneg %p156
        $region82: #{tpu_custom_call.1} parent=71 // pred_check_branch
          %455 = sbr.rel (%p453) target = $region84
        $region83: #{tpu_custom_call.1} parent=71 // pred_region
          %456 = dma.done [#allocation6], 1536
        $region84: #{tpu_custom_call.1} parent=71 // pred_fallthru
          _
        // Predicated region
        $region85: #{tpu_custom_call.1} parent=71 // pred_check
          %p457 = pneg %p240
        $region86: #{tpu_custom_call.1} parent=71 // pred_check_branch
          %459 = sbr.rel (%p457) target = $region88
        $region87: #{tpu_custom_call.1} parent=71 // pred_region
          %460 = dma.done [#allocation9], 512
        $region88: #{tpu_custom_call.1} parent=71 // pred_fallthru
          _
        // Predicated region
        $region89: #{tpu_custom_call.1} parent=71 // pred_check
          %p461 = pneg %p282
        $region90: #{tpu_custom_call.1} parent=71 // pred_check_branch
          %463 = sbr.rel (%p461) target = $region92
        $region91: #{tpu_custom_call.1} parent=71 // pred_region
          %464 = dma.done [#allocation9], 512
        $region92: #{tpu_custom_call.1} parent=71 // pred_fallthru
          _
        %p465 = scmp.lt.s32.totalorder %s30, 1
        %s466 = scalar_select %p465, %s30, 1
        %s467 = smul.addr %s466, 2
        %s468 = smul.addr %s467, 8
        %s469 = scalar_lea.vmem %s0, %s468
        %p470 = pneg %p51
        %p471 = pneg %p48
        %p472 = pneg %p72
        %p473 = pneg %p69
        %p474 = pneg %p93
        %p475 = pneg %p90
        %p476 = pneg %p114
        %p477 = pneg %p111
        %p478 = pneg %p135
        %p479 = pneg %p132
        %p480 = pneg %p156
        %p481 = pneg %p153
        %p482 = pneg %p177
        %p483 = pneg %p174
        %p484 = pneg %p198
        %p485 = pneg %p195
        %p486 = pneg %p219
        %p487 = pneg %p216
        %p488 = pneg %p240
        %p489 = pneg %p237
        %p490 = pneg %p261
        %p491 = pneg %p258
        %p492 = pneg %p282
        %p493 = pneg %p279
        %p494 = pneg %p303
        %p495 = pneg %p300
        %p496 = pneg %p329
        %p497 = pneg %p326
        %s498 = sand.u32 %s316, 1
        %s499 = scalar_lea.sflag [#allocation4], %s498
        %s500 = sand.u32 %s316, 1
        %s501 = smul.addr %s500, 16
        %s502 = scalar_lea.vmem [#allocation11], %s501
        %p503 = scmp.lt.s32.totalorder %s30, 1
        %s504 = scalar_select %p503, %s30, 1
        %s505 = smul.addr %s504, 2
        %s506 = smul.addr %s505, 8
        %s507 = scalar_lea.vmem %s0, %s506
        %v509 = vld [vmem:[%s507] sm:$0xff]
        %v510 = vld [vmem:[%s507 + $0x8] sm:$0xff]
        %v511 = vld [vmem:[#allocation2] sm:$0x1]
        %513 = vset.pattern.permute.xlu0 0
        %514 = vperm.xlu0 %513, %v509
        %v515 = vpop.permute.xlu0 %514
        %518 = vset.pattern.permute.xlu0 0
        %519 = vperm.xlu0 %518, %v510
        %v520 = vpop.permute.xlu0 %519
        %v523 = vlaneseq
        %v524 = vshrl.u32 %v523, 7
        %v525 = vsub.s32 0, %v524
        %v526 = vrot.slane %v511, %v525
        %v528 = vmul.f32 %v515, %v526
        %v529 = vmul.f32 %v520, %v526
        %v530 = vld [vmem:[#allocation5] sm:$0x1]
        %v532 = vlaneseq
        %v533 = vshrl.u32 %v532, 7
        %v534 = vsub.s32 0, %v533
        %v535 = vrot.slane %v530, %v534
        %v537 = vadd.f32 %v528, %v535
        %v538 = vadd.f32 %v529, %v535
        %v539 = vlaneseq
        %v540 = vshrl.u32 %v539, 7
        %v541 = vadd.s32 %v540, 8
        %v542 = vrot.slane %v537, 1
        %v543 = vrot.slane %v538, 1
        %vm544 = vcmp.lt.s32.totalorder %v540, 7
        %v545 = vsel %vm544, %v542, %v543
        %v546 = vsel %vm544, %v543, %v542
        %vm547 = vcmp.ge.s32.totalorder %v540, 15
        %vm548 = vcmp.ge.s32.totalorder %v541, 15
        %v549 = vsel %vm547, -1.0, %v545
        %v550 = vsel %vm548, -1.0, %v546
        %553 = vrot.lane.b32.xlu0 %v549, 32
        %v554 = vpop.permute.xlu0 %553
        %555 = vrot.lane.b32.xlu0 %v550, 32
        %v556 = vpop.permute.xlu0 %555
        %vm559 = vcmask 261120
        %v560 = vsel %vm559, %v537, %v554
        %v561 = vsel %vm559, %v538, %v556
        %v562 = vpack.c.bf16 %v561, %v560
        %v563 = vld [vmem:[%s3] sm:$0xf]
        %v564 = vld [vmem:[%s3 + $0x4] sm:$0xf]
        %v565 = vld [vmem:[%s3 + $0x8] sm:$0xf]
        %v566 = vld [vmem:[%s3 + $0xc] sm:$0xf]
        %v567 = vld [vmem:[%s3 + $0x10] sm:$0xf]
        %v568 = vld [vmem:[%s3 + $0x14] sm:$0xf]
        %v569 = vld [vmem:[%s3 + $0x18] sm:$0xf]
        %v570 = vld [vmem:[%s3 + $0x1c] sm:$0xf]
        %v571 = vld [vmem:[%s4] sm:$0x1]
        %v573 = vlaneseq
        %v574 = vshrl.u32 %v573, 7
        %v575 = vsub.s32 0, %v574
        %v576 = vrot.slane %v571, %v575
        %v586 = vunpack.c.l.b16 %v563
        %v587 = vunpack.c.l.b16 %v564
        %v588 = vunpack.c.l.b16 %v565
        %v589 = vunpack.c.l.b16 %v566
        %v590 = vunpack.c.l.b16 %v567
        %v591 = vunpack.c.l.b16 %v568
        %v592 = vunpack.c.l.b16 %v569
        %v593 = vunpack.c.l.b16 %v570
        %v594 = vpack.c.b16 %v587, %v586
        %v595 = vpack.c.b16 %v589, %v588
        %v596 = vpack.c.b16 %v591, %v590
        %v597 = vpack.c.b16 %v593, %v592
        %vm602 = vcmask 523264
        %v604 = vsel %vm602, %v562, 0
        %606 = vmatprep.subr.bf16.mxu0 0
        %607 = vmatpush1.bf16.msra.mxu0 0
        %608 = vmatprep.subr.bf16.mxu0 0
        %609 = vmatpush1.bf16.msra.mxu0 0
        %610 = vmatprep.subr.bf16.mxu0 0
        %611 = vmatpush1.bf16.msra.mxu0 0
        %612 = vmatprep.subr.bf16.mxu0 0
        %613 = vmatpush1.bf16.msra.mxu0 0
        %614 = vmatprep.subr.bf16.mxu0 0
        %615 = vmatpush1.bf16.msra.mxu0 %v597
        %616 = vmatprep.subr.bf16.mxu0 0
        %617 = vmatpush1.bf16.msra.mxu0 %v596
        %618 = vmatprep.subr.bf16.mxu0 0
        %619 = vmatpush1.bf16.msra.mxu0 %v595
        %620 = vmatprep.subr.bf16.mxu0 0
        %621 = vmatpush1.bf16.msra.mxu0 %v594
        %622 = vmatprep.subr.bf16.mxu0 0
        %623 = vmatpush2.bf16.msra.mxu0 0
        %624 = vmatprep.subr.bf16.mxu0 0
        %625 = vmatpush2.bf16.msra.mxu0 0
        %626 = vmatprep.subr.bf16.mxu0 0
        %627 = vmatpush2.bf16.msra.mxu0 0
        %628 = vmatprep.subr.bf16.mxu0 0
        %629 = vmatpush2.bf16.msra.mxu0 0
        %630 = vmatprep.subr.bf16.mxu0 0
        %631 = vmatpush2.bf16.msra.mxu0 0
        %632 = vmatprep.subr.bf16.mxu0 0
        %633 = vmatpush2.bf16.msra.mxu0 0
        %634 = vmatprep.subr.bf16.mxu0 0
        %635 = vmatpush2.bf16.msra.mxu0 0
        %636 = vmatprep.subr.bf16.mxu0 0
        %637 = vmatpush2.bf16.msra.mxu0 0
        %638 = vmatprep.mubr.bf16.mxu0 0
        %639 = vmatmul.mubr.bf16.gmra.mxu0 %v604
        %v640 = vpop.f32.mrf.mxu0
        %v641 = vadd.f32 %v576, %v640
        %v642 = vpop.f32.mrf.mxu0
        %v643 = vpop.f32.mrf.mxu0
        %v644 = vadd.f32 %v576, %v643
        %v645 = vpop.f32.mrf.mxu0
        %646 = vdwg.mxu0
        %v647 = vtanh.pop %v641
        %v648 = vtanh.pop %v644
        %v649 = vmul.f32 %v647, 0.5
        %v650 = vmul.f32 %v648, 0.5
        %v651 = vadd.f32 %v649, 0.5
        %v652 = vadd.f32 %v650, 0.5
        %655 = vrot.lane.b32.xlu0 %v651, 96
        %v656 = vpop.permute.xlu0 %655
        %657 = vrot.lane.b32.xlu0 %v652, 96
        %v658 = vpop.permute.xlu0 %657
        %v661 = vmul.f32 %v647, %v656
        %v662 = vmul.f32 %v648, %v658
        %v663 = vpack.c.bf16 %v662, %v661
        %v664 = vld [vmem:[#allocation7] sm:$0xf]
        %v665 = vld [vmem:[#allocation7 + $0x4] sm:$0xf]
        %v666 = vld [vmem:[#allocation7 + $0x8] sm:$0xf]
        %v667 = vld [vmem:[#allocation7 + $0xc] sm:$0xf]
        %v672 = vunpack.c.l.b16 %v664
        %v673 = vunpack.c.l.b16 %v665
        %v674 = vunpack.c.l.b16 %v666
        %v675 = vunpack.c.l.b16 %v667
        %v676 = vpack.c.b16 %v673, %v672
        %v677 = vpack.c.b16 %v675, %v674
        %v681 = vsel %vm559, %v663, 0
        %683 = vmatprep.subr.bf16.mxu0 0
        %684 = vmatpush1.bf16.msra.mxu0 0
        %685 = vmatprep.subr.bf16.mxu0 0
        %686 = vmatpush1.bf16.msra.mxu0 0
        %687 = vmatprep.subr.bf16.mxu0 0
        %688 = vmatpush1.bf16.msra.mxu0 0
        %689 = vmatprep.subr.bf16.mxu0 0
        %690 = vmatpush1.bf16.msra.mxu0 0
        %691 = vmatprep.subr.bf16.mxu0 0
        %692 = vmatpush1.bf16.msra.mxu0 0
        %693 = vmatprep.subr.bf16.mxu0 0
        %694 = vmatpush1.bf16.msra.mxu0 0
        %695 = vmatprep.subr.bf16.mxu0 0
        %696 = vmatpush1.bf16.msra.mxu0 %v677
        %697 = vmatprep.subr.bf16.mxu0 0
        %698 = vmatpush1.bf16.msra.mxu0 %v676
        %699 = vmatprep.subr.bf16.mxu0 0
        %700 = vmatpush2.bf16.msra.mxu0 0
        %701 = vmatprep.subr.bf16.mxu0 0
        %702 = vmatpush2.bf16.msra.mxu0 0
        %703 = vmatprep.subr.bf16.mxu0 0
        %704 = vmatpush2.bf16.msra.mxu0 0
        %705 = vmatprep.subr.bf16.mxu0 0
        %706 = vmatpush2.bf16.msra.mxu0 0
        %707 = vmatprep.subr.bf16.mxu0 0
        %708 = vmatpush2.bf16.msra.mxu0 0
        %709 = vmatprep.subr.bf16.mxu0 0
        %710 = vmatpush2.bf16.msra.mxu0 0
        %711 = vmatprep.subr.bf16.mxu0 0
        %712 = vmatpush2.bf16.msra.mxu0 0
        %713 = vmatprep.subr.bf16.mxu0 0
        %714 = vmatpush2.bf16.msra.mxu0 0
        %715 = vmatprep.mubr.bf16.mxu0 0
        %716 = vmatmul.mubr.bf16.gmra.mxu0 %v681
        %v717 = vpop.f32.mrf.mxu0
        %v718 = vadd.f32 0.0, %v717
        %v719 = vpop.f32.mrf.mxu0
        %v720 = vpop.f32.mrf.mxu0
        %v721 = vadd.f32 0.0, %v720
        %v722 = vpop.f32.mrf.mxu0
        %723 = vdwg.mxu0
        %v724 = vadd.f32 %v537, %v718
        %v725 = vadd.f32 %v538, %v721
        %v726 = vld [vmem:[%s6] sm:$0x1]
        %v728 = vlaneseq
        %v729 = vshrl.u32 %v728, 7
        %v730 = vsub.s32 0, %v729
        %v731 = vrot.slane %v726, %v730
        %v733 = vadd.f32 %v724, %v731
        %v734 = vadd.f32 %v725, %v731
        %v735 = vrot.slane %v733, 2
        %v736 = vrot.slane %v734, 2
        %vm737 = vcmp.lt.s32.totalorder %v540, 6
        %v738 = vsel %vm737, %v735, %v736
        %v739 = vsel %vm737, %v736, %v735
        %vm740 = vcmp.ge.s32.totalorder %v540, 14
        %vm741 = vcmp.ge.s32.totalorder %v541, 14
        %v742 = vsel %vm740, -1.0, %v738
        %v743 = vsel %vm741, -1.0, %v739
        %746 = vrot.lane.b32.xlu0 %v742, 32
        %v747 = vpop.permute.xlu0 %746
        %748 = vrot.lane.b32.xlu0 %v743, 32
        %v749 = vpop.permute.xlu0 %748
        %v752 = vsel %vm559, %v733, %v747
        %v753 = vsel %vm559, %v734, %v749
        %v754 = vpack.c.bf16 %v753, %v752
        %s755 = scalar_lea.vmem %s3, 32
        %v756 = vld [vmem:[%s755] sm:$0xf]
        %v757 = vld [vmem:[%s755 + $0x4] sm:$0xf]
        %v758 = vld [vmem:[%s755 + $0x8] sm:$0xf]
        %v759 = vld [vmem:[%s755 + $0xc] sm:$0xf]
        %v760 = vld [vmem:[%s755 + $0x10] sm:$0xf]
        %v761 = vld [vmem:[%s755 + $0x14] sm:$0xf]
        %v762 = vld [vmem:[%s755 + $0x18] sm:$0xf]
        %v763 = vld [vmem:[%s755 + $0x1c] sm:$0xf]
        %s764 = scalar_lea.vmem %s4, 1
        %v765 = vld [vmem:[%s764] sm:$0x1]
        %v767 = vlaneseq
        %v768 = vshrl.u32 %v767, 7
        %v769 = vsub.s32 0, %v768
        %v770 = vrot.slane %v765, %v769
        %v780 = vunpack.c.l.b16 %v756
        %v781 = vunpack.c.l.b16 %v757
        %v782 = vunpack.c.l.b16 %v758
        %v783 = vunpack.c.l.b16 %v759
        %v784 = vunpack.c.l.b16 %v760
        %v785 = vunpack.c.l.b16 %v761
        %v786 = vunpack.c.l.b16 %v762
        %v787 = vunpack.c.l.b16 %v763
        %v788 = vpack.c.b16 %v781, %v780
        %v789 = vpack.c.b16 %v783, %v782
        %v790 = vpack.c.b16 %v785, %v784
        %v791 = vpack.c.b16 %v787, %v786
        %v797 = vsel %vm602, %v754, 0
        %799 = vmatprep.subr.bf16.mxu0 0
        %800 = vmatpush1.bf16.msra.mxu0 0
        %801 = vmatprep.subr.bf16.mxu0 0
        %802 = vmatpush1.bf16.msra.mxu0 0
        %803 = vmatprep.subr.bf16.mxu0 0
        %804 = vmatpush1.bf16.msra.mxu0 0
        %805 = vmatprep.subr.bf16.mxu0 0
        %806 = vmatpush1.bf16.msra.mxu0 0
        %807 = vmatprep.subr.bf16.mxu0 0
        %808 = vmatpush1.bf16.msra.mxu0 %v791
        %809 = vmatprep.subr.bf16.mxu0 0
        %810 = vmatpush1.bf16.msra.mxu0 %v790
        %811 = vmatprep.subr.bf16.mxu0 0
        %812 = vmatpush1.bf16.msra.mxu0 %v789
        %813 = vmatprep.subr.bf16.mxu0 0
        %814 = vmatpush1.bf16.msra.mxu0 %v788
        %815 = vmatprep.subr.bf16.mxu0 0
        %816 = vmatpush2.bf16.msra.mxu0 0
        %817 = vmatprep.subr.bf16.mxu0 0
        %818 = vmatpush2.bf16.msra.mxu0 0
        %819 = vmatprep.subr.bf16.mxu0 0
        %820 = vmatpush2.bf16.msra.mxu0 0
        %821 = vmatprep.subr.bf16.mxu0 0
        %822 = vmatpush2.bf16.msra.mxu0 0
        %823 = vmatprep.subr.bf16.mxu0 0
        %824 = vmatpush2.bf16.msra.mxu0 0
        %825 = vmatprep.subr.bf16.mxu0 0
        %826 = vmatpush2.bf16.msra.mxu0 0
        %827 = vmatprep.subr.bf16.mxu0 0
        %828 = vmatpush2.bf16.msra.mxu0 0
        %829 = vmatprep.subr.bf16.mxu0 0
        %830 = vmatpush2.bf16.msra.mxu0 0
        %831 = vmatprep.mubr.bf16.mxu0 0
        %832 = vmatmul.mubr.bf16.gmra.mxu0 %v797
        %v833 = vpop.f32.mrf.mxu0
        %v834 = vadd.f32 %v770, %v833
        %v835 = vpop.f32.mrf.mxu0
        %v836 = vpop.f32.mrf.mxu0
        %v837 = vadd.f32 %v770, %v836
        %v838 = vpop.f32.mrf.mxu0
        %839 = vdwg.mxu0
        %v840 = vtanh.pop %v834
        %v841 = vtanh.pop %v837
        %v842 = vmul.f32 %v840, 0.5
        %v843 = vmul.f32 %v841, 0.5
        %v844 = vadd.f32 %v842, 0.5
        %v845 = vadd.f32 %v843, 0.5
        %848 = vrot.lane.b32.xlu0 %v844, 96
        %v849 = vpop.permute.xlu0 %848
        %850 = vrot.lane.b32.xlu0 %v845, 96
        %v851 = vpop.permute.xlu0 %850
        %v854 = vmul.f32 %v840, %v849
        %v855 = vmul.f32 %v841, %v851
        %v856 = vpack.c.bf16 %v855, %v854
        %s857 = scalar_lea.vmem [#allocation7], 16
        %v858 = vld [vmem:[%s857] sm:$0xf]
        %v859 = vld [vmem:[%s857 + $0x4] sm:$0xf]
        %v860 = vld [vmem:[%s857 + $0x8] sm:$0xf]
        %v861 = vld [vmem:[%s857 + $0xc] sm:$0xf]
        %v866 = vunpack.c.l.b16 %v858
        %v867 = vunpack.c.l.b16 %v859
        %v868 = vunpack.c.l.b16 %v860
        %v869 = vunpack.c.l.b16 %v861
        %v870 = vpack.c.b16 %v867, %v866
        %v871 = vpack.c.b16 %v869, %v868
        %v875 = vsel %vm559, %v856, 0
        %877 = vmatprep.subr.bf16.mxu0 0
        %878 = vmatpush1.bf16.msra.mxu0 0
        %879 = vmatprep.subr.bf16.mxu0 0
        %880 = vmatpush1.bf16.msra.mxu0 0
        %881 = vmatprep.subr.bf16.mxu0 0
        %882 = vmatpush1.bf16.msra.mxu0 0
        %883 = vmatprep.subr.bf16.mxu0 0
        %884 = vmatpush1.bf16.msra.mxu0 0
        %885 = vmatprep.subr.bf16.mxu0 0
        %886 = vmatpush1.bf16.msra.mxu0 0
        %887 = vmatprep.subr.bf16.mxu0 0
        %888 = vmatpush1.bf16.msra.mxu0 0
        %889 = vmatprep.subr.bf16.mxu0 0
        %890 = vmatpush1.bf16.msra.mxu0 %v871
        %891 = vmatprep.subr.bf16.mxu0 0
        %892 = vmatpush1.bf16.msra.mxu0 %v870
        %893 = vmatprep.subr.bf16.mxu0 0
        %894 = vmatpush2.bf16.msra.mxu0 0
        %895 = vmatprep.subr.bf16.mxu0 0
        %896 = vmatpush2.bf16.msra.mxu0 0
        %897 = vmatprep.subr.bf16.mxu0 0
        %898 = vmatpush2.bf16.msra.mxu0 0
        %899 = vmatprep.subr.bf16.mxu0 0
        %900 = vmatpush2.bf16.msra.mxu0 0
        %901 = vmatprep.subr.bf16.mxu0 0
        %902 = vmatpush2.bf16.msra.mxu0 0
        %903 = vmatprep.subr.bf16.mxu0 0
        %904 = vmatpush2.bf16.msra.mxu0 0
        %905 = vmatprep.subr.bf16.mxu0 0
        %906 = vmatpush2.bf16.msra.mxu0 0
        %907 = vmatprep.subr.bf16.mxu0 0
        %908 = vmatpush2.bf16.msra.mxu0 0
        %909 = vmatprep.mubr.bf16.mxu0 0
        %910 = vmatmul.mubr.bf16.gmra.mxu0 %v875
        %v911 = vpop.f32.mrf.mxu0
        %v912 = vadd.f32 0.0, %v911
        %v913 = vpop.f32.mrf.mxu0
        %v914 = vpop.f32.mrf.mxu0
        %v915 = vadd.f32 0.0, %v914
        %v916 = vpop.f32.mrf.mxu0
        %917 = vdwg.mxu0
        %v918 = vadd.f32 %v733, %v912
        %v919 = vadd.f32 %v734, %v915
        %s920 = scalar_lea.vmem %s6, 1
        %v921 = vld [vmem:[%s920] sm:$0x1]
        %v923 = vlaneseq
        %v924 = vshrl.u32 %v923, 7
        %v925 = vsub.s32 0, %v924
        %v926 = vrot.slane %v921, %v925
        %v928 = vadd.f32 %v918, %v926
        %v929 = vadd.f32 %v919, %v926
        %v930 = vrot.slane %v928, 4
        %v931 = vrot.slane %v929, 4
        %vm932 = vcmp.lt.s32.totalorder %v540, 4
        %v933 = vsel %vm932, %v930, %v931
        %v934 = vsel %vm932, %v931, %v930
        %vm935 = vcmp.ge.s32.totalorder %v540, 12
        %vm936 = vcmp.ge.s32.totalorder %v541, 12
        %v937 = vsel %vm935, -1.0, %v933
        %v938 = vsel %vm936, -1.0, %v934
        %941 = vrot.lane.b32.xlu0 %v937, 32
        %v942 = vpop.permute.xlu0 %941
        %943 = vrot.lane.b32.xlu0 %v938, 32
        %v944 = vpop.permute.xlu0 %943
        %v947 = vsel %vm559, %v928, %v942
        %v948 = vsel %vm559, %v929, %v944
        %v949 = vpack.c.bf16 %v948, %v947
        %s950 = scalar_lea.vmem %s3, 64
        %v951 = vld [vmem:[%s950] sm:$0xf]
        %v952 = vld [vmem:[%s950 + $0x4] sm:$0xf]
        %v953 = vld [vmem:[%s950 + $0x8] sm:$0xf]
        %v954 = vld [vmem:[%s950 + $0xc] sm:$0xf]
        %v955 = vld [vmem:[%s950 + $0x10] sm:$0xf]
        %v956 = vld [vmem:[%s950 + $0x14] sm:$0xf]
        %v957 = vld [vmem:[%s950 + $0x18] sm:$0xf]
        %v958 = vld [vmem:[%s950 + $0x1c] sm:$0xf]
        %s959 = scalar_lea.vmem %s4, 2
        %v960 = vld [vmem:[%s959] sm:$0x1]
        %v962 = vlaneseq
        %v963 = vshrl.u32 %v962, 7
        %v964 = vsub.s32 0, %v963
        %v965 = vrot.slane %v960, %v964
        %v975 = vunpack.c.l.b16 %v951
        %v976 = vunpack.c.l.b16 %v952
        %v977 = vunpack.c.l.b16 %v953
        %v978 = vunpack.c.l.b16 %v954
        %v979 = vunpack.c.l.b16 %v955
        %v980 = vunpack.c.l.b16 %v956
        %v981 = vunpack.c.l.b16 %v957
        %v982 = vunpack.c.l.b16 %v958
        %v983 = vpack.c.b16 %v976, %v975
        %v984 = vpack.c.b16 %v978, %v977
        %v985 = vpack.c.b16 %v980, %v979
        %v986 = vpack.c.b16 %v982, %v981
        %v992 = vsel %vm602, %v949, 0
        %994 = vmatprep.subr.bf16.mxu0 0
        %995 = vmatpush1.bf16.msra.mxu0 0
        %996 = vmatprep.subr.bf16.mxu0 0
        %997 = vmatpush1.bf16.msra.mxu0 0
        %998 = vmatprep.subr.bf16.mxu0 0
        %999 = vmatpush1.bf16.msra.mxu0 0
        %1000 = vmatprep.subr.bf16.mxu0 0
        %1001 = vmatpush1.bf16.msra.mxu0 0
        %1002 = vmatprep.subr.bf16.mxu0 0
        %1003 = vmatpush1.bf16.msra.mxu0 %v986
        %1004 = vmatprep.subr.bf16.mxu0 0
        %1005 = vmatpush1.bf16.msra.mxu0 %v985
        %1006 = vmatprep.subr.bf16.mxu0 0
        %1007 = vmatpush1.bf16.msra.mxu0 %v984
        %1008 = vmatprep.subr.bf16.mxu0 0
        %1009 = vmatpush1.bf16.msra.mxu0 %v983
        %1010 = vmatprep.subr.bf16.mxu0 0
        %1011 = vmatpush2.bf16.msra.mxu0 0
        %1012 = vmatprep.subr.bf16.mxu0 0
        %1013 = vmatpush2.bf16.msra.mxu0 0
        %1014 = vmatprep.subr.bf16.mxu0 0
        %1015 = vmatpush2.bf16.msra.mxu0 0
        %1016 = vmatprep.subr.bf16.mxu0 0
        %1017 = vmatpush2.bf16.msra.mxu0 0
        %1018 = vmatprep.subr.bf16.mxu0 0
        %1019 = vmatpush2.bf16.msra.mxu0 0
        %1020 = vmatprep.subr.bf16.mxu0 0
        %1021 = vmatpush2.bf16.msra.mxu0 0
        %1022 = vmatprep.subr.bf16.mxu0 0
        %1023 = vmatpush2.bf16.msra.mxu0 0
        %1024 = vmatprep.subr.bf16.mxu0 0
        %1025 = vmatpush2.bf16.msra.mxu0 0
        %1026 = vmatprep.mubr.bf16.mxu0 0
        %1027 = vmatmul.mubr.bf16.gmra.mxu0 %v992
        %v1028 = vpop.f32.mrf.mxu0
        %v1029 = vadd.f32 %v965, %v1028
        %v1030 = vpop.f32.mrf.mxu0
        %v1031 = vpop.f32.mrf.mxu0
        %v1032 = vadd.f32 %v965, %v1031
        %v1033 = vpop.f32.mrf.mxu0
        %1034 = vdwg.mxu0
        %v1035 = vtanh.pop %v1029
        %v1036 = vtanh.pop %v1032
        %v1037 = vmul.f32 %v1035, 0.5
        %v1038 = vmul.f32 %v1036, 0.5
        %v1039 = vadd.f32 %v1037, 0.5
        %v1040 = vadd.f32 %v1038, 0.5
        %1043 = vrot.lane.b32.xlu0 %v1039, 96
        %v1044 = vpop.permute.xlu0 %1043
        %1045 = vrot.lane.b32.xlu0 %v1040, 96
        %v1046 = vpop.permute.xlu0 %1045
        %v1049 = vmul.f32 %v1035, %v1044
        %v1050 = vmul.f32 %v1036, %v1046
        %v1051 = vpack.c.bf16 %v1050, %v1049
        %s1052 = scalar_lea.vmem [#allocation7], 32
        %v1053 = vld [vmem:[%s1052] sm:$0xf]
        %v1054 = vld [vmem:[%s1052 + $0x4] sm:$0xf]
        %v1055 = vld [vmem:[%s1052 + $0x8] sm:$0xf]
        %v1056 = vld [vmem:[%s1052 + $0xc] sm:$0xf]
        %v1061 = vunpack.c.l.b16 %v1053
        %v1062 = vunpack.c.l.b16 %v1054
        %v1063 = vunpack.c.l.b16 %v1055
        %v1064 = vunpack.c.l.b16 %v1056
        %v1065 = vpack.c.b16 %v1062, %v1061
        %v1066 = vpack.c.b16 %v1064, %v1063
        %v1070 = vsel %vm559, %v1051, 0
        %1072 = vmatprep.subr.bf16.mxu0 0
        %1073 = vmatpush1.bf16.msra.mxu0 0
        %1074 = vmatprep.subr.bf16.mxu0 0
        %1075 = vmatpush1.bf16.msra.mxu0 0
        %1076 = vmatprep.subr.bf16.mxu0 0
        %1077 = vmatpush1.bf16.msra.mxu0 0
        %1078 = vmatprep.subr.bf16.mxu0 0
        %1079 = vmatpush1.bf16.msra.mxu0 0
        %1080 = vmatprep.subr.bf16.mxu0 0
        %1081 = vmatpush1.bf16.msra.mxu0 0
        %1082 = vmatprep.subr.bf16.mxu0 0
        %1083 = vmatpush1.bf16.msra.mxu0 0
        %1084 = vmatprep.subr.bf16.mxu0 0
        %1085 = vmatpush1.bf16.msra.mxu0 %v1066
        %1086 = vmatprep.subr.bf16.mxu0 0
        %1087 = vmatpush1.bf16.msra.mxu0 %v1065
        %1088 = vmatprep.subr.bf16.mxu0 0
        %1089 = vmatpush2.bf16.msra.mxu0 0
        %1090 = vmatprep.subr.bf16.mxu0 0
        %1091 = vmatpush2.bf16.msra.mxu0 0
        %1092 = vmatprep.subr.bf16.mxu0 0
        %1093 = vmatpush2.bf16.msra.mxu0 0
        %1094 = vmatprep.subr.bf16.mxu0 0
        %1095 = vmatpush2.bf16.msra.mxu0 0
        %1096 = vmatprep.subr.bf16.mxu0 0
        %1097 = vmatpush2.bf16.msra.mxu0 0
        %1098 = vmatprep.subr.bf16.mxu0 0
        %1099 = vmatpush2.bf16.msra.mxu0 0
        %1100 = vmatprep.subr.bf16.mxu0 0
        %1101 = vmatpush2.bf16.msra.mxu0 0
        %1102 = vmatprep.subr.bf16.mxu0 0
        %1103 = vmatpush2.bf16.msra.mxu0 0
        %1104 = vmatprep.mubr.bf16.mxu0 0
        %1105 = vmatmul.mubr.bf16.gmra.mxu0 %v1070
        %v1106 = vpop.f32.mrf.mxu0
        %v1107 = vadd.f32 0.0, %v1106
        %v1108 = vpop.f32.mrf.mxu0
        %v1109 = vpop.f32.mrf.mxu0
        %v1110 = vadd.f32 0.0, %v1109
        %v1111 = vpop.f32.mrf.mxu0
        %1112 = vdwg.mxu0
        %v1113 = vadd.f32 %v928, %v1107
        %v1114 = vadd.f32 %v929, %v1110
        %s1115 = scalar_lea.vmem %s6, 2
        %v1116 = vld [vmem:[%s1115] sm:$0x1]
        %v1118 = vlaneseq
        %v1119 = vshrl.u32 %v1118, 7
        %v1120 = vsub.s32 0, %v1119
        %v1121 = vrot.slane %v1116, %v1120
        %v1123 = vadd.f32 %v1113, %v1121
        %v1124 = vadd.f32 %v1114, %v1121
        %v1125 = vrot.slane %v1123, 1
        %v1126 = vrot.slane %v1124, 1
        %v1127 = vsel %vm544, %v1125, %v1126
        %v1128 = vsel %vm544, %v1126, %v1125
        %v1129 = vsel %vm547, -1.0, %v1127
        %v1130 = vsel %vm548, -1.0, %v1128
        %1133 = vrot.lane.b32.xlu0 %v1129, 32
        %v1134 = vpop.permute.xlu0 %1133
        %1135 = vrot.lane.b32.xlu0 %v1130, 32
        %v1136 = vpop.permute.xlu0 %1135
        %v1139 = vsel %vm559, %v1123, %v1134
        %v1140 = vsel %vm559, %v1124, %v1136
        %v1141 = vpack.c.bf16 %v1140, %v1139
        %s1142 = scalar_lea.vmem %s3, 96
        %v1143 = vld [vmem:[%s1142] sm:$0xf]
        %v1144 = vld [vmem:[%s1142 + $0x4] sm:$0xf]
        %v1145 = vld [vmem:[%s1142 + $0x8] sm:$0xf]
        %v1146 = vld [vmem:[%s1142 + $0xc] sm:$0xf]
        %v1147 = vld [vmem:[%s1142 + $0x10] sm:$0xf]
        %v1148 = vld [vmem:[%s1142 + $0x14] sm:$0xf]
        %v1149 = vld [vmem:[%s1142 + $0x18] sm:$0xf]
        %v1150 = vld [vmem:[%s1142 + $0x1c] sm:$0xf]
        %s1151 = scalar_lea.vmem %s4, 3
        %v1152 = vld [vmem:[%s1151] sm:$0x1]
        %v1154 = vlaneseq
        %v1155 = vshrl.u32 %v1154, 7
        %v1156 = vsub.s32 0, %v1155
        %v1157 = vrot.slane %v1152, %v1156
        %v1167 = vunpack.c.l.b16 %v1143
        %v1168 = vunpack.c.l.b16 %v1144
        %v1169 = vunpack.c.l.b16 %v1145
        %v1170 = vunpack.c.l.b16 %v1146
        %v1171 = vunpack.c.l.b16 %v1147
        %v1172 = vunpack.c.l.b16 %v1148
        %v1173 = vunpack.c.l.b16 %v1149
        %v1174 = vunpack.c.l.b16 %v1150
        %v1175 = vpack.c.b16 %v1168, %v1167
        %v1176 = vpack.c.b16 %v1170, %v1169
        %v1177 = vpack.c.b16 %v1172, %v1171
        %v1178 = vpack.c.b16 %v1174, %v1173
        %v1184 = vsel %vm602, %v1141, 0
        %1186 = vmatprep.subr.bf16.mxu0 0
        %1187 = vmatpush1.bf16.msra.mxu0 0
        %1188 = vmatprep.subr.bf16.mxu0 0
        %1189 = vmatpush1.bf16.msra.mxu0 0
        %1190 = vmatprep.subr.bf16.mxu0 0
        %1191 = vmatpush1.bf16.msra.mxu0 0
        %1192 = vmatprep.subr.bf16.mxu0 0
        %1193 = vmatpush1.bf16.msra.mxu0 0
        %1194 = vmatprep.subr.bf16.mxu0 0
        %1195 = vmatpush1.bf16.msra.mxu0 %v1178
        %1196 = vmatprep.subr.bf16.mxu0 0
        %1197 = vmatpush1.bf16.msra.mxu0 %v1177
        %1198 = vmatprep.subr.bf16.mxu0 0
        %1199 = vmatpush1.bf16.msra.mxu0 %v1176
        %1200 = vmatprep.subr.bf16.mxu0 0
        %1201 = vmatpush1.bf16.msra.mxu0 %v1175
        %1202 = vmatprep.subr.bf16.mxu0 0
        %1203 = vmatpush2.bf16.msra.mxu0 0
        %1204 = vmatprep.subr.bf16.mxu0 0
        %1205 = vmatpush2.bf16.msra.mxu0 0
        %1206 = vmatprep.subr.bf16.mxu0 0
        %1207 = vmatpush2.bf16.msra.mxu0 0
        %1208 = vmatprep.subr.bf16.mxu0 0
        %1209 = vmatpush2.bf16.msra.mxu0 0
        %1210 = vmatprep.subr.bf16.mxu0 0
        %1211 = vmatpush2.bf16.msra.mxu0 0
        %1212 = vmatprep.subr.bf16.mxu0 0
        %1213 = vmatpush2.bf16.msra.mxu0 0
        %1214 = vmatprep.subr.bf16.mxu0 0
        %1215 = vmatpush2.bf16.msra.mxu0 0
        %1216 = vmatprep.subr.bf16.mxu0 0
        %1217 = vmatpush2.bf16.msra.mxu0 0
        %1218 = vmatprep.mubr.bf16.mxu0 0
        %1219 = vmatmul.mubr.bf16.gmra.mxu0 %v1184
        %v1220 = vpop.f32.mrf.mxu0
        %v1221 = vadd.f32 %v1157, %v1220
        %v1222 = vpop.f32.mrf.mxu0
        %v1223 = vpop.f32.mrf.mxu0
        %v1224 = vadd.f32 %v1157, %v1223
        %v1225 = vpop.f32.mrf.mxu0
        %1226 = vdwg.mxu0
        %v1227 = vtanh.pop %v1221
        %v1228 = vtanh.pop %v1224
        %v1229 = vmul.f32 %v1227, 0.5
        %v1230 = vmul.f32 %v1228, 0.5
        %v1231 = vadd.f32 %v1229, 0.5
        %v1232 = vadd.f32 %v1230, 0.5
        %1235 = vrot.lane.b32.xlu0 %v1231, 96
        %v1236 = vpop.permute.xlu0 %1235
        %1237 = vrot.lane.b32.xlu0 %v1232, 96
        %v1238 = vpop.permute.xlu0 %1237
        %v1241 = vmul.f32 %v1227, %v1236
        %v1242 = vmul.f32 %v1228, %v1238
        %v1243 = vpack.c.bf16 %v1242, %v1241
        %s1244 = scalar_lea.vmem [#allocation7], 48
        %v1245 = vld [vmem:[%s1244] sm:$0xf]
        %v1246 = vld [vmem:[%s1244 + $0x4] sm:$0xf]
        %v1247 = vld [vmem:[%s1244 + $0x8] sm:$0xf]
        %v1248 = vld [vmem:[%s1244 + $0xc] sm:$0xf]
        %v1253 = vunpack.c.l.b16 %v1245
        %v1254 = vunpack.c.l.b16 %v1246
        %v1255 = vunpack.c.l.b16 %v1247
        %v1256 = vunpack.c.l.b16 %v1248
        %v1257 = vpack.c.b16 %v1254, %v1253
        %v1258 = vpack.c.b16 %v1256, %v1255
        %v1262 = vsel %vm559, %v1243, 0
        %1264 = vmatprep.subr.bf16.mxu0 0
        %1265 = vmatpush1.bf16.msra.mxu0 0
        %1266 = vmatprep.subr.bf16.mxu0 0
        %1267 = vmatpush1.bf16.msra.mxu0 0
        %1268 = vmatprep.subr.bf16.mxu0 0
        %1269 = vmatpush1.bf16.msra.mxu0 0
        %1270 = vmatprep.subr.bf16.mxu0 0
        %1271 = vmatpush1.bf16.msra.mxu0 0
        %1272 = vmatprep.subr.bf16.mxu0 0
        %1273 = vmatpush1.bf16.msra.mxu0 0
        %1274 = vmatprep.subr.bf16.mxu0 0
        %1275 = vmatpush1.bf16.msra.mxu0 0
        %1276 = vmatprep.subr.bf16.mxu0 0
        %1277 = vmatpush1.bf16.msra.mxu0 %v1258
        %1278 = vmatprep.subr.bf16.mxu0 0
        %1279 = vmatpush1.bf16.msra.mxu0 %v1257
        %1280 = vmatprep.subr.bf16.mxu0 0
        %1281 = vmatpush2.bf16.msra.mxu0 0
        %1282 = vmatprep.subr.bf16.mxu0 0
        %1283 = vmatpush2.bf16.msra.mxu0 0
        %1284 = vmatprep.subr.bf16.mxu0 0
        %1285 = vmatpush2.bf16.msra.mxu0 0
        %1286 = vmatprep.subr.bf16.mxu0 0
        %1287 = vmatpush2.bf16.msra.mxu0 0
        %1288 = vmatprep.subr.bf16.mxu0 0
        %1289 = vmatpush2.bf16.msra.mxu0 0
        %1290 = vmatprep.subr.bf16.mxu0 0
        %1291 = vmatpush2.bf16.msra.mxu0 0
        %1292 = vmatprep.subr.bf16.mxu0 0
        %1293 = vmatpush2.bf16.msra.mxu0 0
        %1294 = vmatprep.subr.bf16.mxu0 0
        %1295 = vmatpush2.bf16.msra.mxu0 0
        %1296 = vmatprep.mubr.bf16.mxu0 0
        %1297 = vmatmul.mubr.bf16.gmra.mxu0 %v1262
        %v1298 = vpop.f32.mrf.mxu0
        %v1299 = vadd.f32 0.0, %v1298
        %v1300 = vpop.f32.mrf.mxu0
        %v1301 = vpop.f32.mrf.mxu0
        %v1302 = vadd.f32 0.0, %v1301
        %v1303 = vpop.f32.mrf.mxu0
        %1304 = vdwg.mxu0
        %v1305 = vadd.f32 %v1123, %v1299
        %v1306 = vadd.f32 %v1124, %v1302
        %s1307 = scalar_lea.vmem %s6, 3
        %v1308 = vld [vmem:[%s1307] sm:$0x1]
        %v1310 = vlaneseq
        %v1311 = vshrl.u32 %v1310, 7
        %v1312 = vsub.s32 0, %v1311
        %v1313 = vrot.slane %v1308, %v1312
        %v1315 = vadd.f32 %v1305, %v1313
        %v1316 = vadd.f32 %v1306, %v1313
        %v1317 = vrot.slane %v1315, 2
        %v1318 = vrot.slane %v1316, 2
        %v1319 = vsel %vm737, %v1317, %v1318
        %v1320 = vsel %vm737, %v1318, %v1317
        %v1321 = vsel %vm740, -1.0, %v1319
        %v1322 = vsel %vm741, -1.0, %v1320
        %1325 = vrot.lane.b32.xlu0 %v1321, 32
        %v1326 = vpop.permute.xlu0 %1325
        %1327 = vrot.lane.b32.xlu0 %v1322, 32
        %v1328 = vpop.permute.xlu0 %1327
        %v1331 = vsel %vm559, %v1315, %v1326
        %v1332 = vsel %vm559, %v1316, %v1328
        %v1333 = vpack.c.bf16 %v1332, %v1331
        %s1334 = scalar_lea.vmem %s3, 128
        %v1335 = vld [vmem:[%s1334] sm:$0xf]
        %v1336 = vld [vmem:[%s1334 + $0x4] sm:$0xf]
        %v1337 = vld [vmem:[%s1334 + $0x8] sm:$0xf]
        %v1338 = vld [vmem:[%s1334 + $0xc] sm:$0xf]
        %v1339 = vld [vmem:[%s1334 + $0x10] sm:$0xf]
        %v1340 = vld [vmem:[%s1334 + $0x14] sm:$0xf]
        %v1341 = vld [vmem:[%s1334 + $0x18] sm:$0xf]
        %v1342 = vld [vmem:[%s1334 + $0x1c] sm:$0xf]
        %s1343 = scalar_lea.vmem %s4, 4
        %v1344 = vld [vmem:[%s1343] sm:$0x1]
        %v1346 = vlaneseq
        %v1347 = vshrl.u32 %v1346, 7
        %v1348 = vsub.s32 0, %v1347
        %v1349 = vrot.slane %v1344, %v1348
        %v1359 = vunpack.c.l.b16 %v1335
        %v1360 = vunpack.c.l.b16 %v1336
        %v1361 = vunpack.c.l.b16 %v1337
        %v1362 = vunpack.c.l.b16 %v1338
        %v1363 = vunpack.c.l.b16 %v1339
        %v1364 = vunpack.c.l.b16 %v1340
        %v1365 = vunpack.c.l.b16 %v1341
        %v1366 = vunpack.c.l.b16 %v1342
        %v1367 = vpack.c.b16 %v1360, %v1359
        %v1368 = vpack.c.b16 %v1362, %v1361
        %v1369 = vpack.c.b16 %v1364, %v1363
        %v1370 = vpack.c.b16 %v1366, %v1365
        %v1376 = vsel %vm602, %v1333, 0
        %1378 = vmatprep.subr.bf16.mxu0 0
        %1379 = vmatpush1.bf16.msra.mxu0 0
        %1380 = vmatprep.subr.bf16.mxu0 0
        %1381 = vmatpush1.bf16.msra.mxu0 0
        %1382 = vmatprep.subr.bf16.mxu0 0
        %1383 = vmatpush1.bf16.msra.mxu0 0
        %1384 = vmatprep.subr.bf16.mxu0 0
        %1385 = vmatpush1.bf16.msra.mxu0 0
        %1386 = vmatprep.subr.bf16.mxu0 0
        %1387 = vmatpush1.bf16.msra.mxu0 %v1370
        %1388 = vmatprep.subr.bf16.mxu0 0
        %1389 = vmatpush1.bf16.msra.mxu0 %v1369
        %1390 = vmatprep.subr.bf16.mxu0 0
        %1391 = vmatpush1.bf16.msra.mxu0 %v1368
        %1392 = vmatprep.subr.bf16.mxu0 0
        %1393 = vmatpush1.bf16.msra.mxu0 %v1367
        %1394 = vmatprep.subr.bf16.mxu0 0
        %1395 = vmatpush2.bf16.msra.mxu0 0
        %1396 = vmatprep.subr.bf16.mxu0 0
        %1397 = vmatpush2.bf16.msra.mxu0 0
        %1398 = vmatprep.subr.bf16.mxu0 0
        %1399 = vmatpush2.bf16.msra.mxu0 0
        %1400 = vmatprep.subr.bf16.mxu0 0
        %1401 = vmatpush2.bf16.msra.mxu0 0
        %1402 = vmatprep.subr.bf16.mxu0 0
        %1403 = vmatpush2.bf16.msra.mxu0 0
        %1404 = vmatprep.subr.bf16.mxu0 0
        %1405 = vmatpush2.bf16.msra.mxu0 0
        %1406 = vmatprep.subr.bf16.mxu0 0
        %1407 = vmatpush2.bf16.msra.mxu0 0
        %1408 = vmatprep.subr.bf16.mxu0 0
        %1409 = vmatpush2.bf16.msra.mxu0 0
        %1410 = vmatprep.mubr.bf16.mxu0 0
        %1411 = vmatmul.mubr.bf16.gmra.mxu0 %v1376
        %v1412 = vpop.f32.mrf.mxu0
        %v1413 = vadd.f32 %v1349, %v1412
        %v1414 = vpop.f32.mrf.mxu0
        %v1415 = vpop.f32.mrf.mxu0
        %v1416 = vadd.f32 %v1349, %v1415
        %v1417 = vpop.f32.mrf.mxu0
        %1418 = vdwg.mxu0
        %v1419 = vtanh.pop %v1413
        %v1420 = vtanh.pop %v1416
        %v1421 = vmul.f32 %v1419, 0.5
        %v1422 = vmul.f32 %v1420, 0.5
        %v1423 = vadd.f32 %v1421, 0.5
        %v1424 = vadd.f32 %v1422, 0.5
        %1427 = vrot.lane.b32.xlu0 %v1423, 96
        %v1428 = vpop.permute.xlu0 %1427
        %1429 = vrot.lane.b32.xlu0 %v1424, 96
        %v1430 = vpop.permute.xlu0 %1429
        %v1433 = vmul.f32 %v1419, %v1428
        %v1434 = vmul.f32 %v1420, %v1430
        %v1435 = vpack.c.bf16 %v1434, %v1433
        %s1436 = scalar_lea.vmem [#allocation7], 64
        %v1437 = vld [vmem:[%s1436] sm:$0xf]
        %v1438 = vld [vmem:[%s1436 + $0x4] sm:$0xf]
        %v1439 = vld [vmem:[%s1436 + $0x8] sm:$0xf]
        %v1440 = vld [vmem:[%s1436 + $0xc] sm:$0xf]
        %v1445 = vunpack.c.l.b16 %v1437
        %v1446 = vunpack.c.l.b16 %v1438
        %v1447 = vunpack.c.l.b16 %v1439
        %v1448 = vunpack.c.l.b16 %v1440
        %v1449 = vpack.c.b16 %v1446, %v1445
        %v1450 = vpack.c.b16 %v1448, %v1447
        %v1454 = vsel %vm559, %v1435, 0
        %1456 = vmatprep.subr.bf16.mxu0 0
        %1457 = vmatpush1.bf16.msra.mxu0 0
        %1458 = vmatprep.subr.bf16.mxu0 0
        %1459 = vmatpush1.bf16.msra.mxu0 0
        %1460 = vmatprep.subr.bf16.mxu0 0
        %1461 = vmatpush1.bf16.msra.mxu0 0
        %1462 = vmatprep.subr.bf16.mxu0 0
        %1463 = vmatpush1.bf16.msra.mxu0 0
        %1464 = vmatprep.subr.bf16.mxu0 0
        %1465 = vmatpush1.bf16.msra.mxu0 0
        %1466 = vmatprep.subr.bf16.mxu0 0
        %1467 = vmatpush1.bf16.msra.mxu0 0
        %1468 = vmatprep.subr.bf16.mxu0 0
        %1469 = vmatpush1.bf16.msra.mxu0 %v1450
        %1470 = vmatprep.subr.bf16.mxu0 0
        %1471 = vmatpush1.bf16.msra.mxu0 %v1449
        %1472 = vmatprep.subr.bf16.mxu0 0
        %1473 = vmatpush2.bf16.msra.mxu0 0
        %1474 = vmatprep.subr.bf16.mxu0 0
        %1475 = vmatpush2.bf16.msra.mxu0 0
        %1476 = vmatprep.subr.bf16.mxu0 0
        %1477 = vmatpush2.bf16.msra.mxu0 0
        %1478 = vmatprep.subr.bf16.mxu0 0
        %1479 = vmatpush2.bf16.msra.mxu0 0
        %1480 = vmatprep.subr.bf16.mxu0 0
        %1481 = vmatpush2.bf16.msra.mxu0 0
        %1482 = vmatprep.subr.bf16.mxu0 0
        %1483 = vmatpush2.bf16.msra.mxu0 0
        %1484 = vmatprep.subr.bf16.mxu0 0
        %1485 = vmatpush2.bf16.msra.mxu0 0
        %1486 = vmatprep.subr.bf16.mxu0 0
        %1487 = vmatpush2.bf16.msra.mxu0 0
        %1488 = vmatprep.mubr.bf16.mxu0 0
        %1489 = vmatmul.mubr.bf16.gmra.mxu0 %v1454
        %v1490 = vpop.f32.mrf.mxu0
        %v1491 = vadd.f32 0.0, %v1490
        %v1492 = vpop.f32.mrf.mxu0
        %v1493 = vpop.f32.mrf.mxu0
        %v1494 = vadd.f32 0.0, %v1493
        %v1495 = vpop.f32.mrf.mxu0
        %1496 = vdwg.mxu0
        %v1497 = vadd.f32 %v1315, %v1491
        %v1498 = vadd.f32 %v1316, %v1494
        %s1499 = scalar_lea.vmem %s6, 4
        %v1500 = vld [vmem:[%s1499] sm:$0x1]
        %v1502 = vlaneseq
        %v1503 = vshrl.u32 %v1502, 7
        %v1504 = vsub.s32 0, %v1503
        %v1505 = vrot.slane %v1500, %v1504
        %v1507 = vadd.f32 %v1497, %v1505
        %v1508 = vadd.f32 %v1498, %v1505
        %v1509 = vrot.slane %v1507, 4
        %v1510 = vrot.slane %v1508, 4
        %v1511 = vsel %vm932, %v1509, %v1510
        %v1512 = vsel %vm932, %v1510, %v1509
        %v1513 = vsel %vm935, -1.0, %v1511
        %v1514 = vsel %vm936, -1.0, %v1512
        %1517 = vrot.lane.b32.xlu0 %v1513, 32
        %v1518 = vpop.permute.xlu0 %1517
        %1519 = vrot.lane.b32.xlu0 %v1514, 32
        %v1520 = vpop.permute.xlu0 %1519
        %v1523 = vsel %vm559, %v1507, %v1518
        %v1524 = vsel %vm559, %v1508, %v1520
        %v1525 = vpack.c.bf16 %v1524, %v1523
        %s1526 = scalar_lea.vmem %s3, 160
        %v1527 = vld [vmem:[%s1526] sm:$0xf]
        %v1528 = vld [vmem:[%s1526 + $0x4] sm:$0xf]
        %v1529 = vld [vmem:[%s1526 + $0x8] sm:$0xf]
        %v1530 = vld [vmem:[%s1526 + $0xc] sm:$0xf]
        %v1531 = vld [vmem:[%s1526 + $0x10] sm:$0xf]
        %v1532 = vld [vmem:[%s1526 + $0x14] sm:$0xf]
        %v1533 = vld [vmem:[%s1526 + $0x18] sm:$0xf]
        %v1534 = vld [vmem:[%s1526 + $0x1c] sm:$0xf]
        %s1535 = scalar_lea.vmem %s4, 5
        %v1536 = vld [vmem:[%s1535] sm:$0x1]
        %v1538 = vlaneseq
        %v1539 = vshrl.u32 %v1538, 7
        %v1540 = vsub.s32 0, %v1539
        %v1541 = vrot.slane %v1536, %v1540
        %v1551 = vunpack.c.l.b16 %v1527
        %v1552 = vunpack.c.l.b16 %v1528
        %v1553 = vunpack.c.l.b16 %v1529
        %v1554 = vunpack.c.l.b16 %v1530
        %v1555 = vunpack.c.l.b16 %v1531
        %v1556 = vunpack.c.l.b16 %v1532
        %v1557 = vunpack.c.l.b16 %v1533
        %v1558 = vunpack.c.l.b16 %v1534
        %v1559 = vpack.c.b16 %v1552, %v1551
        %v1560 = vpack.c.b16 %v1554, %v1553
        %v1561 = vpack.c.b16 %v1556, %v1555
        %v1562 = vpack.c.b16 %v1558, %v1557
        %v1568 = vsel %vm602, %v1525, 0
        %1570 = vmatprep.subr.bf16.mxu0 0
        %1571 = vmatpush1.bf16.msra.mxu0 0
        %1572 = vmatprep.subr.bf16.mxu0 0
        %1573 = vmatpush1.bf16.msra.mxu0 0
        %1574 = vmatprep.subr.bf16.mxu0 0
        %1575 = vmatpush1.bf16.msra.mxu0 0
        %1576 = vmatprep.subr.bf16.mxu0 0
        %1577 = vmatpush1.bf16.msra.mxu0 0
        %1578 = vmatprep.subr.bf16.mxu0 0
        %1579 = vmatpush1.bf16.msra.mxu0 %v1562
        %1580 = vmatprep.subr.bf16.mxu0 0
        %1581 = vmatpush1.bf16.msra.mxu0 %v1561
        %1582 = vmatprep.subr.bf16.mxu0 0
        %1583 = vmatpush1.bf16.msra.mxu0 %v1560
        %1584 = vmatprep.subr.bf16.mxu0 0
        %1585 = vmatpush1.bf16.msra.mxu0 %v1559
        %1586 = vmatprep.subr.bf16.mxu0 0
        %1587 = vmatpush2.bf16.msra.mxu0 0
        %1588 = vmatprep.subr.bf16.mxu0 0
        %1589 = vmatpush2.bf16.msra.mxu0 0
        %1590 = vmatprep.subr.bf16.mxu0 0
        %1591 = vmatpush2.bf16.msra.mxu0 0
        %1592 = vmatprep.subr.bf16.mxu0 0
        %1593 = vmatpush2.bf16.msra.mxu0 0
        %1594 = vmatprep.subr.bf16.mxu0 0
        %1595 = vmatpush2.bf16.msra.mxu0 0
        %1596 = vmatprep.subr.bf16.mxu0 0
        %1597 = vmatpush2.bf16.msra.mxu0 0
        %1598 = vmatprep.subr.bf16.mxu0 0
        %1599 = vmatpush2.bf16.msra.mxu0 0
        %1600 = vmatprep.subr.bf16.mxu0 0
        %1601 = vmatpush2.bf16.msra.mxu0 0
        %1602 = vmatprep.mubr.bf16.mxu0 0
        %1603 = vmatmul.mubr.bf16.gmra.mxu0 %v1568
        %v1604 = vpop.f32.mrf.mxu0
        %v1605 = vadd.f32 %v1541, %v1604
        %v1606 = vpop.f32.mrf.mxu0
        %v1607 = vpop.f32.mrf.mxu0
        %v1608 = vadd.f32 %v1541, %v1607
        %v1609 = vpop.f32.mrf.mxu0
        %1610 = vdwg.mxu0
        %v1611 = vtanh.pop %v1605
        %v1612 = vtanh.pop %v1608
        %v1613 = vmul.f32 %v1611, 0.5
        %v1614 = vmul.f32 %v1612, 0.5
        %v1615 = vadd.f32 %v1613, 0.5
        %v1616 = vadd.f32 %v1614, 0.5
        %1619 = vrot.lane.b32.xlu0 %v1615, 96
        %v1620 = vpop.permute.xlu0 %1619
        %1621 = vrot.lane.b32.xlu0 %v1616, 96
        %v1622 = vpop.permute.xlu0 %1621
        %v1625 = vmul.f32 %v1611, %v1620
        %v1626 = vmul.f32 %v1612, %v1622
        %1629 = vrot.lane.b32.xlu0 %v854, 32
        %v1630 = vpop.permute.xlu0 %1629
        %1631 = vrot.lane.b32.xlu0 %v855, 32
        %v1632 = vpop.permute.xlu0 %1631
        %1637 = vrot.lane.b32.xlu0 %v1049, 64
        %v1638 = vpop.permute.xlu0 %1637
        %1639 = vrot.lane.b32.xlu0 %v1050, 64
        %v1640 = vpop.permute.xlu0 %1639
        %1645 = vrot.lane.b32.xlu0 %v1241, 96
        %v1646 = vpop.permute.xlu0 %1645
        %1647 = vrot.lane.b32.xlu0 %v1242, 96
        %v1648 = vpop.permute.xlu0 %1647
        %1653 = vrot.lane.b32.xlu0 %v1625, 32
        %v1654 = vpop.permute.xlu0 %1653
        %1655 = vrot.lane.b32.xlu0 %v1626, 32
        %v1656 = vpop.permute.xlu0 %1655
        %v1659 = vsel %vm559, %v661, %v1630
        %v1660 = vsel %vm559, %v662, %v1632
        %v1661 = vsel %vm602, %v1659, %v1638
        %v1662 = vsel %vm602, %v1660, %v1640
        %vm1663 = vcmask 785408
        %v1664 = vsel %vm1663, %v1661, %v1646
        %v1665 = vsel %vm1663, %v1662, %v1648
        %v1666 = vsel %vm559, %v1433, %v1654
        %v1667 = vsel %vm559, %v1434, %v1656
        %v1668 = vpack.c.bf16 %v1665, %v1664
        %v1669 = vpack.c.bf16 %v1667, %v1666
        %v1670 = vld [vmem:[%s7] sm:$0xf]
        %v1671 = vld [vmem:[%s7 + $0x4] sm:$0xf]
        %v1672 = vld [vmem:[%s7 + $0x8] sm:$0xf]
        %v1673 = vld [vmem:[%s7 + $0xc] sm:$0xf]
        %v1674 = vld [vmem:[%s7 + $0x10] sm:$0xf]
        %v1675 = vld [vmem:[%s7 + $0x14] sm:$0xf]
        %v1676 = vld [vmem:[%s7 + $0x18] sm:$0xf]
        %v1677 = vld [vmem:[%s7 + $0x1c] sm:$0xf]
        %v1678 = vld [vmem:[%s7 + $0x20] sm:$0xf]
        %v1679 = vld [vmem:[%s7 + $0x24] sm:$0xf]
        %v1680 = vld [vmem:[%s7 + $0x28] sm:$0xf]
        %v1681 = vld [vmem:[%s7 + $0x2c] sm:$0xf]
        %v1682 = vld [vmem:[%s7 + $0x30] sm:$0xf]
        %v1683 = vld [vmem:[%s7 + $0x34] sm:$0xf]
        %v1684 = vld [vmem:[%s7 + $0x38] sm:$0xf]
        %v1685 = vld [vmem:[%s7 + $0x3c] sm:$0xf]
        %v1686 = vld [vmem:[%s7 + $0x40] sm:$0xf]
        %v1687 = vld [vmem:[%s7 + $0x44] sm:$0xf]
        %v1688 = vld [vmem:[%s7 + $0x48] sm:$0xf]
        %v1689 = vld [vmem:[%s7 + $0x4c] sm:$0xf]
        %v1690 = vld [vmem:[%s7 + $0x50] sm:$0xf]
        %v1691 = vld [vmem:[%s7 + $0x54] sm:$0xf]
        %v1692 = vld [vmem:[%s7 + $0x58] sm:$0xf]
        %v1693 = vld [vmem:[%s7 + $0x5c] sm:$0xf]
        %v1694 = vld [vmem:[%s8] sm:$0x1]
        %v1696 = vlaneseq
        %v1697 = vshrl.u32 %v1696, 7
        %v1698 = vsub.s32 0, %v1697
        %v1699 = vrot.slane %v1694, %v1698
        %v1725 = vunpack.c.l.b16 %v1670
        %v1726 = vunpack.c.l.b16 %v1671
        %v1727 = vunpack.c.l.b16 %v1672
        %v1728 = vunpack.c.l.b16 %v1673
        %v1729 = vunpack.c.l.b16 %v1674
        %v1730 = vunpack.c.l.b16 %v1675
        %v1731 = vunpack.c.l.b16 %v1676
        %v1732 = vunpack.c.l.b16 %v1677
        %v1733 = vunpack.c.l.b16 %v1678
        %v1734 = vunpack.c.l.b16 %v1679
        %v1735 = vunpack.c.l.b16 %v1680
        %v1736 = vunpack.c.l.b16 %v1681
        %v1737 = vunpack.c.l.b16 %v1682
        %v1738 = vunpack.c.l.b16 %v1683
        %v1739 = vunpack.c.l.b16 %v1684
        %v1740 = vunpack.c.l.b16 %v1685
        %v1741 = vunpack.c.l.b16 %v1686
        %v1742 = vunpack.c.l.b16 %v1687
        %v1743 = vunpack.c.l.b16 %v1688
        %v1744 = vunpack.c.l.b16 %v1689
        %v1745 = vunpack.c.l.b16 %v1690
        %v1746 = vunpack.c.l.b16 %v1691
        %v1747 = vunpack.c.l.b16 %v1692
        %v1748 = vunpack.c.l.b16 %v1693
        %v1749 = vpack.c.b16 %v1726, %v1725
        %v1750 = vpack.c.b16 %v1728, %v1727
        %v1751 = vpack.c.b16 %v1730, %v1729
        %v1752 = vpack.c.b16 %v1732, %v1731
        %v1753 = vpack.c.b16 %v1734, %v1733
        %v1754 = vpack.c.b16 %v1736, %v1735
        %v1755 = vpack.c.b16 %v1738, %v1737
        %v1756 = vpack.c.b16 %v1740, %v1739
        %v1757 = vpack.c.b16 %v1742, %v1741
        %v1758 = vpack.c.b16 %v1744, %v1743
        %v1759 = vpack.c.b16 %v1746, %v1745
        %v1760 = vpack.c.b16 %v1748, %v1747
        %v1774 = vsel %vm602, %v1669, 0
        %1776 = vmatprep.subr.bf16.mxu0 0
        %1777 = vmatpush1.bf16.msra.mxu0 %v1756
        %1778 = vmatprep.subr.bf16.mxu0 0
        %1779 = vmatpush1.bf16.msra.mxu0 %v1755
        %1780 = vmatprep.subr.bf16.mxu0 0
        %1781 = vmatpush1.bf16.msra.mxu0 %v1754
        %1782 = vmatprep.subr.bf16.mxu0 0
        %1783 = vmatpush1.bf16.msra.mxu0 %v1753
        %1784 = vmatprep.subr.bf16.mxu0 0
        %1785 = vmatpush1.bf16.msra.mxu0 %v1752
        %1786 = vmatprep.subr.bf16.mxu0 0
        %1787 = vmatpush1.bf16.msra.mxu0 %v1751
        %1788 = vmatprep.subr.bf16.mxu0 0
        %1789 = vmatpush1.bf16.msra.mxu0 %v1750
        %1790 = vmatprep.subr.bf16.mxu0 0
        %1791 = vmatpush1.bf16.msra.mxu0 %v1749
        %1792 = vmatprep.subr.bf16.mxu0 0
        %1793 = vmatpush2.bf16.msra.mxu0 0
        %1794 = vmatprep.subr.bf16.mxu0 0
        %1795 = vmatpush2.bf16.msra.mxu0 0
        %1796 = vmatprep.subr.bf16.mxu0 0
        %1797 = vmatpush2.bf16.msra.mxu0 0
        %1798 = vmatprep.subr.bf16.mxu0 0
        %1799 = vmatpush2.bf16.msra.mxu0 0
        %1800 = vmatprep.subr.bf16.mxu0 0
        %1801 = vmatpush2.bf16.msra.mxu0 %v1760
        %1802 = vmatprep.subr.bf16.mxu0 0
        %1803 = vmatpush2.bf16.msra.mxu0 %v1759
        %1804 = vmatprep.subr.bf16.mxu0 0
        %1805 = vmatpush2.bf16.msra.mxu0 %v1758
        %1806 = vmatprep.subr.bf16.mxu0 0
        %1807 = vmatpush2.bf16.msra.mxu0 %v1757
        %1808 = vmatprep.mubr.bf16.mxu0 %v1774
        %1809 = vmatmul.mubr.bf16.gmra.mxu0 %v1668
        %v1810 = vpop.f32.mrf.mxu0
        %v1811 = vadd.f32 %v1699, %v1810
        %v1812 = vpop.f32.mrf.mxu0
        %v1813 = vpop.f32.mrf.mxu0
        %v1814 = vadd.f32 %v1699, %v1813
        %v1815 = vpop.f32.mrf.mxu0
        %1816 = vdwg.mxu0
        %v1817 = vmax.f32 %v1811, 0.0
        %v1818 = vmax.f32 %v1814, 0.0
        %v1819 = vpack.c.bf16 %v1818, %v1817
        %v1820 = vld [vmem:[#allocation8] sm:$0xf]
        %v1821 = vld [vmem:[#allocation8 + $0x4] sm:$0xf]
        %v1822 = vld [vmem:[#allocation8 + $0x8] sm:$0xf]
        %v1823 = vld [vmem:[#allocation8 + $0xc] sm:$0xf]
        %v1824 = vld [vmem:[#allocation8 + $0x10] sm:$0xf]
        %v1825 = vld [vmem:[#allocation8 + $0x14] sm:$0xf]
        %v1826 = vld [vmem:[#allocation8 + $0x18] sm:$0xf]
        %v1827 = vld [vmem:[#allocation8 + $0x1c] sm:$0xf]
        %v1828 = vld [vmem:[%s10] sm:$0x1]
        %v1830 = vlaneseq
        %v1831 = vshrl.u32 %v1830, 7
        %v1832 = vsub.s32 0, %v1831
        %v1833 = vrot.slane %v1828, %v1832
        %v1843 = vunpack.c.l.b16 %v1820
        %v1844 = vunpack.c.l.b16 %v1821
        %v1845 = vunpack.c.l.b16 %v1822
        %v1846 = vunpack.c.l.b16 %v1823
        %v1847 = vunpack.c.l.b16 %v1824
        %v1848 = vunpack.c.l.b16 %v1825
        %v1849 = vunpack.c.l.b16 %v1826
        %v1850 = vunpack.c.l.b16 %v1827
        %v1851 = vpack.c.b16 %v1844, %v1843
        %v1852 = vpack.c.b16 %v1846, %v1845
        %v1853 = vpack.c.b16 %v1848, %v1847
        %v1854 = vpack.c.b16 %v1850, %v1849
        %v1860 = vsel %vm602, %v1819, 0
        %1862 = vmatprep.subr.bf16.mxu0 0
        %1863 = vmatpush1.bf16.msra.mxu0 0
        %1864 = vmatprep.subr.bf16.mxu0 0
        %1865 = vmatpush1.bf16.msra.mxu0 0
        %1866 = vmatprep.subr.bf16.mxu0 0
        %1867 = vmatpush1.bf16.msra.mxu0 0
        %1868 = vmatprep.subr.bf16.mxu0 0
        %1869 = vmatpush1.bf16.msra.mxu0 0
        %1870 = vmatprep.subr.bf16.mxu0 0
        %1871 = vmatpush1.bf16.msra.mxu0 %v1854
        %1872 = vmatprep.subr.bf16.mxu0 0
        %1873 = vmatpush1.bf16.msra.mxu0 %v1853
        %1874 = vmatprep.subr.bf16.mxu0 0
        %1875 = vmatpush1.bf16.msra.mxu0 %v1852
        %1876 = vmatprep.subr.bf16.mxu0 0
        %1877 = vmatpush1.bf16.msra.mxu0 %v1851
        %1878 = vmatprep.subr.bf16.mxu0 0
        %1879 = vmatpush2.bf16.msra.mxu0 0
        %1880 = vmatprep.subr.bf16.mxu0 0
        %1881 = vmatpush2.bf16.msra.mxu0 0
        %1882 = vmatprep.subr.bf16.mxu0 0
        %1883 = vmatpush2.bf16.msra.mxu0 0
        %1884 = vmatprep.subr.bf16.mxu0 0
        %1885 = vmatpush2.bf16.msra.mxu0 0
        %1886 = vmatprep.subr.bf16.mxu0 0
        %1887 = vmatpush2.bf16.msra.mxu0 0
        %1888 = vmatprep.subr.bf16.mxu0 0
        %1889 = vmatpush2.bf16.msra.mxu0 0
        %1890 = vmatprep.subr.bf16.mxu0 0
        %1891 = vmatpush2.bf16.msra.mxu0 0
        %1892 = vmatprep.subr.bf16.mxu0 0
        %1893 = vmatpush2.bf16.msra.mxu0 0
        %1894 = vmatprep.mubr.bf16.mxu0 0
        %1895 = vmatmul.mubr.bf16.gmra.mxu0 %v1860
        %v1896 = vpop.f32.mrf.mxu0
        %v1897 = vadd.f32 %v1833, %v1896
        %v1898 = vpop.f32.mrf.mxu0
        %v1899 = vpop.f32.mrf.mxu0
        %v1900 = vadd.f32 %v1833, %v1899
        %v1901 = vpop.f32.mrf.mxu0
        %1902 = vdwg.mxu0
        %v1903 = vmax.f32 %v1897, 0.0
        %v1904 = vmax.f32 %v1900, 0.0
        %v1905 = vpack.c.bf16 %v1904, %v1903
        %v1906 = vld [vmem:[#allocation10] sm:$0xf]
        %v1907 = vld [vmem:[#allocation10 + $0x4] sm:$0xf]
        %v1908 = vld [vmem:[#allocation10 + $0x8] sm:$0xf]
        %v1909 = vld [vmem:[#allocation10 + $0xc] sm:$0xf]
        %v1910 = vld [vmem:[#allocation10 + $0x10] sm:$0xf]
        %v1911 = vld [vmem:[#allocation10 + $0x14] sm:$0xf]
        %v1912 = vld [vmem:[#allocation10 + $0x18] sm:$0xf]
        %v1913 = vld [vmem:[#allocation10 + $0x1c] sm:$0xf]
        %v1914 = vld [vmem:[%s12] sm:$0x1]
        %v1916 = vlaneseq
        %v1917 = vshrl.u32 %v1916, 7
        %v1918 = vsub.s32 0, %v1917
        %v1919 = vrot.slane %v1914, %v1918
        %v1929 = vunpack.c.l.b16 %v1906
        %v1930 = vunpack.c.l.b16 %v1907
        %v1931 = vunpack.c.l.b16 %v1908
        %v1932 = vunpack.c.l.b16 %v1909
        %v1933 = vunpack.c.l.b16 %v1910
        %v1934 = vunpack.c.l.b16 %v1911
        %v1935 = vunpack.c.l.b16 %v1912
        %v1936 = vunpack.c.l.b16 %v1913
        %v1937 = vpack.c.b16 %v1930, %v1929
        %v1938 = vpack.c.b16 %v1932, %v1931
        %v1939 = vpack.c.b16 %v1934, %v1933
        %v1940 = vpack.c.b16 %v1936, %v1935
        %v1946 = vsel %vm602, %v1905, 0
        %1948 = vmatprep.subr.bf16.mxu0 0
        %1949 = vmatpush1.bf16.msra.mxu0 0
        %1950 = vmatprep.subr.bf16.mxu0 0
        %1951 = vmatpush1.bf16.msra.mxu0 0
        %1952 = vmatprep.subr.bf16.mxu0 0
        %1953 = vmatpush1.bf16.msra.mxu0 0
        %1954 = vmatprep.subr.bf16.mxu0 0
        %1955 = vmatpush1.bf16.msra.mxu0 0
        %1956 = vmatprep.subr.bf16.mxu0 0
        %1957 = vmatpush1.bf16.msra.mxu0 %v1940
        %1958 = vmatprep.subr.bf16.mxu0 0
        %1959 = vmatpush1.bf16.msra.mxu0 %v1939
        %1960 = vmatprep.subr.bf16.mxu0 0
        %1961 = vmatpush1.bf16.msra.mxu0 %v1938
        %1962 = vmatprep.subr.bf16.mxu0 0
        %1963 = vmatpush1.bf16.msra.mxu0 %v1937
        %1964 = vmatprep.subr.bf16.mxu0 0
        %1965 = vmatpush2.bf16.msra.mxu0 0
        %1966 = vmatprep.subr.bf16.mxu0 0
        %1967 = vmatpush2.bf16.msra.mxu0 0
        %1968 = vmatprep.subr.bf16.mxu0 0
        %1969 = vmatpush2.bf16.msra.mxu0 0
        %1970 = vmatprep.subr.bf16.mxu0 0
        %1971 = vmatpush2.bf16.msra.mxu0 0
        %1972 = vmatprep.subr.bf16.mxu0 0
        %1973 = vmatpush2.bf16.msra.mxu0 0
        %1974 = vmatprep.subr.bf16.mxu0 0
        %1975 = vmatpush2.bf16.msra.mxu0 0
        %1976 = vmatprep.subr.bf16.mxu0 0
        %1977 = vmatpush2.bf16.msra.mxu0 0
        %1978 = vmatprep.subr.bf16.mxu0 0
        %1979 = vmatpush2.bf16.msra.mxu0 0
        %1980 = vmatprep.mubr.bf16.mxu0 0
        %1981 = vmatmul.mubr.bf16.gmra.mxu0 %v1946
        %v1982 = vpop.f32.mrf.mxu0
        %v1983 = vadd.f32 %v1919, %v1982
        %v1984 = vpop.f32.mrf.mxu0
        %v1985 = vpop.f32.mrf.mxu0
        %v1986 = vadd.f32 %v1919, %v1985
        %v1987 = vpop.f32.mrf.mxu0
        %1988 = vdwg.mxu0
        %1989 = vst [vmem:[%s502] sm:$0xff] %v1983
        %1990 = vst [vmem:[%s502 + $0x8] sm:$0xff] %v1986
        %s1991 = sand.u32 %s316, 1
        %s1992 = scalar_lea.sflag [#allocation4], %s1991
        %s1993 = sand.u32 %s316, 1
        %s1994 = smul.addr %s1993, 16
        %s1995 = scalar_lea.vmem [#allocation11], %s1994
        // Predicated region
        $region93: #{tpu_custom_call.1} parent=71 // pred_check
          %p1996 = pneg %p326
        $region94: #{tpu_custom_call.1} parent=71 // pred_check_branch
          %1998 = sbr.rel (%p1996) target = $region96
        $region95: #{tpu_custom_call.1} parent=71 // pred_region
          %s2000 = ssub.s32 256, 256
          %2001 = vsyncadd %s1992, %s2000
          %s2002 = smul.addr %s30, 2
          %s2003 = smul.addr %s2002, 128
          %s2004 = scalar_lea.hbm %s13, %s2003
          %s2005 = sshll.u32 %s1995, 4
          %s2006 = int_to_ptr.vmem [resolvable:$true] %s2005
          %2011 = dma.vmem_to_hbm [thread:$0]  %s2006, 256, %s2004, %s1992, 128, 128, 8
        $region96: #{tpu_custom_call.1} parent=71 // pred_fallthru
          _
      $region72: #{tpu_custom_call.1} parent=5 // pred_fallthru
        _
      %p2012 = scmp.le.s32.totalorder 2, %s25
      // Predicated region
      $region97: #{tpu_custom_call.1} parent=5 // pred_check
        %p2013 = pneg %p2012
      $region98: #{tpu_custom_call.1} parent=5 // pred_check_branch
        %2015 = sbr.rel (%p2013) target = $region100
      $region99: #{tpu_custom_call.1} parent=5 // pred_region
        %s2016 = ssub.s32 %s25, 2
        // Predicated region
        $region101: #{tpu_custom_call.1} parent=99 // pred_check
          %p2017 = pneg %p332
        $region102: #{tpu_custom_call.1} parent=99 // pred_check_branch
          %2019 = sbr.rel (%p2017) target = $region104
        $region103: #{tpu_custom_call.1} parent=99 // pred_region
          %s2020 = sand.u32 %s317, 1
          %s2021 = scalar_lea.sflag [#allocation4], %s2020
          %s2022 = sand.u32 %s317, 1
          %s2023 = smul.addr %s2022, 16
          %s2024 = scalar_lea.vmem [#allocation11], %s2023
          %2025 = dma.done %s2021, 256
        $region104: #{tpu_custom_call.1} parent=99 // pred_fallthru
          _
      $region100: #{tpu_custom_call.1} parent=5 // pred_fallthru
        _
    $region6: #{tpu_custom_call.1} parent=1 // loop_footer
      %s29 = sadd.s32 1, %s25
    $region7: #{tpu_custom_call.1} parent=1 // loop_footer_branch
      %24 = sbr.rel target = $region3
    $region8: #{tpu_custom_call.1} parent=1 // loop_exit
      _
    %2026 = vsyncpa [#allocation3], 1
    %s2027 = scalar_lea.sflag [#allocation3], 1
    %2028 = vsyncpa %s2027, 1
    %2029 = vsyncpa [#allocation6], 1
    %2030 = vsyncpa [#allocation9], 1
    %2031 = vsyncpa [#allocation4], 1
    %s2032 = scalar_lea.sflag [#allocation4], 1
    %2033 = vsyncpa %s2032, 1

</llo_original>
